<compile_context>
chip_gen: v6e
topology: v6e:2x2x1
jax: 0.10.0
libtpu: 0.0.40
codegen_flags: <defaults>
</compile_context>

<pallas_src>
import functools

import jax
import jax.numpy as jnp
from jax.experimental import pallas as pl
from jax.experimental.pallas import tpu as pltpu


def down_kernel(x_ref, w1_ref, b1_ref, w2_ref, b2_ref, o_ref,
                pad1_ref, pad2_ref, *, Nb, Hp, Wp, Cin, Cmid, Cout, P):
    M = Nb * Hp * Wp
    cdt = pad1_ref.dtype                      # matmul operand dtype (bf16)

    # ---- 2x2 max pool ----------------------------------------------------
    # Input layout is tap-major: row 4*nb + t of the block holds pool tap
    # t = 2*i + j (pixel (2h+i, 2w+j)) of image nb.  Each tap is a leading-dim
    # slab, so the three maxima are pure VPU work (no lane-offset slicing).
    x = x_ref[...].reshape(Nb, 4, Hp, Wp, Cin)
    pooled = jnp.maximum(jnp.maximum(x[:, 0], x[:, 1]),
                         jnp.maximum(x[:, 2], x[:, 3]))       # (Nb,Hp,Wp,Cin)

    # Width-edge masks: the ONLY selects in the conv path (the two +-1-row
    # shifted taps per conv).  Keep them select-based so the uninitialized
    # slack rows of the scratch buffers can never leak into the result.
    w_idx = jax.lax.broadcasted_iota(jnp.int32, (M, 1), 0) % Wp
    not_first_col = w_idx >= 1
    not_last_col = w_idx < (Wp - 1)

    def height_pack(a, c):
        # (Nb,Hp,Wp,c) -> (M, 3c): per row, [x(h-1) | x(h) | x(h+1)] packed on
        # the lane (MXU contraction) axis, zeros at the h edges.  The h shifts
        # are slices/concats along a non-tiled dim -> no sublane relayout.
        zplane = jnp.zeros((Nb, 1, Wp, c), a.dtype)
        if Hp > 1:
            up = jnp.concatenate([zplane, a[:, :Hp - 1]], axis=1)
            down = jnp.concatenate([a[:, 1:], zplane], axis=1)
        else:
            up = jnp.zeros_like(a)
            down = jnp.zeros_like(a)
        return jnp.concatenate([up, a, down], axis=-1).reshape(M, 3 * c)

    def conv3x3(pad_ref, w_ref, packed, c_out):
        # K-packed 3x3 conv: 3 MXU matmuls with K = 3*C (one per width tap).
        # The +-1 width shifts are row-offset loads from the flat VMEM buffer.
        pad_ref[pl.ds(P, M), :] = packed                 # aligned dense store
        acc = jnp.zeros((M, c_out), jnp.float32)
        for kw in range(3):
            dw = kw - 1
            patch = pad_ref[pl.ds(P + dw, M), :]
            if dw == -1:
                patch = jnp.where(not_first_col, patch, jnp.zeros_like(patch))
            elif dw == 1:
                patch = jnp.where(not_last_col, patch, jnp.zeros_like(patch))
            acc = acc + jnp.dot(patch, w_ref[kw],
                                preferred_element_type=jnp.float32)
        return acc

    # ---- conv1 (BN scale folded into weights) -> +bias -> ReLU ----
    h = conv3x3(pad1_ref, w1_ref, height_pack(pooled, Cin), Cmid)
    h = jnp.maximum(h + b1_ref[...], 0.0)                     # f32 elementwise

    # ---- conv2 (BN scale folded into weights) -> +bias -> ReLU ----
    h4 = h.reshape(Nb, Hp, Wp, Cmid).astype(cdt)
    y = conv3x3(pad2_ref, w2_ref, height_pack(h4, Cmid), Cout)
    y = jnp.maximum(y + b2_ref[...], 0.0)

    o_ref[...] = y                                            # (M, Cout) f32


def down_forward(x_nchw, w1_pt, s1, b1, w2_pt, s2, b2,
                 *, compute_dtype=jnp.bfloat16, block_batch=None):
    """Down block: MaxPool2d(2) -> [Conv3x3(no bias) -> BN -> ReLU] x 2.

    x_nchw: (N, Cin, H, W); weights in PyTorch OIHW layout; s*/b* are the
    eval-mode BatchNorm stats folded to per-channel scale/bias:
        s = gamma / sqrt(running_var + eps),  b = beta - running_mean * s
    Returns NCHW float32.
    """
    N, Cin, H, W = x_nchw.shape
    assert H % 2 == 0 and W % 2 == 0, "MaxPool2d(2) path assumes even H, W"
    Hp, Wp = H // 2, W // 2
    Cmid, Cout = w1_pt.shape[0], w2_pt.shape[0]
    P = 8                                 # sublane-aligned slack rows per end

    # Images per grid step: grow M = Nb*Hp*Wp for MXU row fill, but keep the
    # grid at >= 2 blocks when the batch allows so a 2-TC part (v7x) can
    # shard the "parallel" axis across both cores.
    if block_batch is None:
        Nb = 1
        for d in range(1, N + 1):
            if N % d:
                continue
            if d > 1 and N // d < 2:
                break
            Nb = d
            if d * Hp * Wp >= 512:
                break
    else:
        Nb = block_batch
    assert N % Nb == 0
    if N // Nb > 1 and (Nb * Hp * Wp) % 8 != 0:
        Nb = N                            # degenerate tiny maps -> one block
    M = Nb * Hp * Wp
    n_blocks = N // Nb

    # Input: NCHW -> tap-major pooled layout (4*N, Hp, Wp, Cin) in bf16
    # (halves HBM read + input VMEM; max-pool commutes with bf16 rounding).
    x = jnp.transpose(x_nchw, (0, 2, 3, 1))                    # NHWC
    x = x.reshape(N, Hp, 2, Wp, 2, Cin).transpose(0, 2, 4, 1, 3, 5)
    x = x.reshape(N * 4, Hp, Wp, Cin).astype(compute_dtype)

    # Weights: fold BN scale (in f32, before the bf16 cast), then
    # OIHW -> (kw, kh*Cin, Cout) so each width tap is one contiguous
    # (3*Cin, Cout) K-packed matmul operand.
    def prep_w(w_pt, s):
        w = w_pt.astype(jnp.float32) * s.astype(jnp.float32)[:, None, None, None]
        w = jnp.transpose(w, (3, 2, 1, 0))            # (kw, kh, Cin, Cout)
        return w.reshape(3, 3 * w.shape[2], w.shape[3]).astype(compute_dtype)

    w1 = prep_w(w1_pt, s1)
    w2 = prep_w(w2_pt, s2)
    b1r = b1.reshape(1, Cmid).astype(jnp.float32)
    b2r = b2.reshape(1, Cout).astype(jnp.float32)

    # Explicit VMEM budget from the actual block/scratch sizes (+ headroom).
    bpe = jnp.dtype(compute_dtype).itemsize
    lanes = lambda c: max(c, 128)                     # lane padding in VMEM
    vmem_need = (
        2 * 4 * Nb * Hp * Wp * lanes(Cin) * bpe       # input block (dbl buf)
        + 2 * M * lanes(Cout) * 4                     # output block (dbl buf)
        + 2 * 3 * lanes(3 * Cin) * lanes(Cmid) * bpe  # weights (dbl buf)
        + 2 * 3 * lanes(3 * Cmid) * lanes(Cout) * bpe
        + (M + 2 * P) * lanes(3 * Cin) * bpe          # pad1 scratch
        + (M + 2 * P) * lanes(3 * Cmid) * bpe         # pad2 scratch
        + 4 * M * lanes(max(Cmid, Cout)) * 4          # live f32 temporaries
    )
    vmem_limit = int(min(max(int(vmem_need * 1.3) + (2 << 20), 32 << 20),
                         64 << 20))

    kernel = functools.partial(down_kernel, Nb=Nb, Hp=Hp, Wp=Wp,
                               Cin=Cin, Cmid=Cmid, Cout=Cout, P=P)

    out = pl.pallas_call(
        kernel,
        out_shape=jax.ShapeDtypeStruct((N * Hp * Wp, Cout), jnp.float32),
        grid_spec=pltpu.PrefetchScalarGridSpec(
            num_scalar_prefetch=0,
            grid=(n_blocks,),
            in_specs=[
                pl.BlockSpec((4 * Nb, Hp, Wp, Cin), lambda n: (n, 0, 0, 0)),
                pl.BlockSpec((3, 3 * Cin, Cmid), lambda n: (0, 0, 0)),
                pl.BlockSpec((1, Cmid), lambda n: (0, 0)),
                pl.BlockSpec((3, 3 * Cmid, Cout), lambda n: (0, 0, 0)),
                pl.BlockSpec((1, Cout), lambda n: (0, 0)),
            ],
            out_specs=pl.BlockSpec((M, Cout), lambda n: (n, 0)),
            scratch_shapes=[
                pltpu.VMEM((M + 2 * P, 3 * Cin), compute_dtype),
                pltpu.VMEM((M + 2 * P, 3 * Cmid), compute_dtype),
            ],
        ),
        compiler_params=pltpu.CompilerParams(
            dimension_semantics=("parallel",),   # images independent
            vmem_limit_bytes=vmem_limit,
        ),
    )(x, w1, b1r, w2, b2r)

    out = out.reshape(N, Hp, Wp, Cout)
    return jnp.transpose(out, (0, 3, 1, 2))       # back to NCHW


def down_reference_nchw(x, w1_pt, g1, be1, rm1, rv1, w2_pt, g2, be2, rm2, rv2,
                        eps=1e-5):
    """Plain-JAX reference matching PyTorch Down (eval-mode BatchNorm)."""
    p = jax.lax.reduce_window(x, -jnp.inf, jax.lax.max,
                              (1, 1, 2, 2), (1, 1, 2, 2), 'VALID')
    y = jax.lax.conv_general_dilated(p, w1_pt, (1, 1), 'SAME',
                                     dimension_numbers=('NCHW', 'OIHW', 'NCHW'))
    y = (y - rm1[None, :, None, None]) / jnp.sqrt(rv1[None, :, None, None] + eps)
    y = y * g1[None, :, None, None] + be1[None, :, None, None]
    y = jnp.maximum(y, 0.0)
    y = jax.lax.conv_general_dilated(y, w2_pt, (1, 1), 'SAME',
                                     dimension_numbers=('NCHW', 'OIHW', 'NCHW'))
    y = (y - rm2[None, :, None, None]) / jnp.sqrt(rv2[None, :, None, None] + eps)
    y = y * g2[None, :, None, None] + be2[None, :, None, None]
    return jnp.maximum(y, 0.0)


if __name__ == "__main__":
    N, Cin, H, W = 2, 4, 16, 16
    Cout = 8
    Cmid = Cout        # DoubleConv: middle_channels defaults to out_channels
    eps = 1e-5

    keys = jax.random.split(jax.random.PRNGKey(0), 11)
    w1_pt = 0.2 * jax.random.normal(keys[0], (Cmid, Cin, 3, 3), jnp.float32)
    g1 = 1.0 + 0.1 * jax.random.normal(keys[1], (Cmid,), jnp.float32)
    be1 = 0.1 * jax.random.normal(keys[2], (Cmid,), jnp.float32)
    rm1 = 0.05 * jax.random.normal(keys[3], (Cmid,), jnp.float32)
    rv1 = 1.0 + 0.1 * jnp.abs(jax.random.normal(keys[4], (Cmid,), jnp.float32))
    w2_pt = 0.2 * jax.random.normal(keys[5], (Cout, Cmid, 3, 3), jnp.float32)
    g2 = 1.0 + 0.1 * jax.random.normal(keys[6], (Cout,), jnp.float32)
    be2 = 0.1 * jax.random.normal(keys[7], (Cout,), jnp.float32)
    rm2 = 0.05 * jax.random.normal(keys[8], (Cout,), jnp.float32)
    rv2 = 1.0 + 0.1 * jnp.abs(jax.random.normal(keys[9], (Cout,), jnp.float32))
    x = jax.random.normal(keys[10], (N, Cin, H, W), jnp.float32)

    # Fold eval-mode BatchNorm into per-channel scale/bias for the kernel.
    s1 = g1 / jnp.sqrt(rv1 + eps)
    b1 = be1 - rm1 * s1
    s2 = g2 / jnp.sqrt(rv2 + eps)
    b2 = be2 - rm2 * s2

    y = jax.jit(down_forward)(x, w1_pt, s1, b1, w2_pt, s2, b2)
    y = jax.block_until_ready(y)
    assert y.shape == (N, Cout, H // 2, W // 2), y.shape

    y_ref = down_reference_nchw(x, w1_pt, g1, be1, rm1, rv1,
                                w2_pt, g2, be2, rm2, rv2, eps)
    max_err = float(jnp.max(jnp.abs(y - y_ref)))
    # Tolerance covers bf16 input / weights / inter-conv activations
    # (f32 accumulation) vs the f32 reference.
    if not max_err < 5e-2:
        raise AssertionError(f"Pallas kernel mismatch vs reference: {max_err}")

    print("KERNEL_OK")
</pallas_src>

<mosaic_0001>
module attributes {stable_mosaic.version = 11 : i64} {
  func.func @down_kernel(%arg0: i32, %arg1: memref<4x8x8x4xbf16, #tpu.memory_space<vmem>>, %arg2: memref<3x12x8xbf16, #tpu.memory_space<vmem>>, %arg3: memref<1x8xf32, #tpu.memory_space<vmem>>, %arg4: memref<3x24x8xbf16, #tpu.memory_space<vmem>>, %arg5: memref<1x8xf32, #tpu.memory_space<vmem>>, %arg6: memref<64x8xf32, #tpu.memory_space<vmem>>, %arg7: memref<80x12xbf16, #tpu.memory_space<vmem>>, %arg8: memref<80x24xbf16, #tpu.memory_space<vmem>>) attributes {dimension_semantics = [#tpu.dimension_semantics<parallel>], iteration_bounds = array<i64: 2>, scalar_prefetch = 0 : i64, scratch_operands = 2 : i64, tpu.core_type = #tpu.core_type<tc>, window_params = [{transform_indices = @transform_0, window_bounds = array<i64: 4, 8, 8, 4>}, {pipeline_mode = #tpu.pipeline_mode<synchronous>, transform_indices = @transform_1, window_bounds = array<i64: 3, 12, 8>}, {pipeline_mode = #tpu.pipeline_mode<synchronous>, transform_indices = @transform_2, window_bounds = array<i64: 1, 8>}, {pipeline_mode = #tpu.pipeline_mode<synchronous>, transform_indices = @transform_3, window_bounds = array<i64: 3, 24, 8>}, {pipeline_mode = #tpu.pipeline_mode<synchronous>, transform_indices = @transform_4, window_bounds = array<i64: 1, 8>}, {transform_indices = @transform_5, window_bounds = array<i64: 64, 8>}]} {
    %c0 = arith.constant 0 : index
    %c0_0 = arith.constant 0 : index
    %c0_1 = arith.constant 0 : index
    %c0_2 = arith.constant 0 : index
    %0 = vector.load %arg1[%c0, %c0_0, %c0_1, %c0_2] : memref<4x8x8x4xbf16, #tpu.memory_space<vmem>>, vector<4x8x8x4xbf16>
    %1 = vector.shape_cast %0 : vector<4x8x8x4xbf16> to vector<1x4x8x8x4xbf16>
    %2 = vector.extract_strided_slice %1 {offsets = [0, 0, 0, 0, 0], sizes = [1, 1, 8, 8, 4], strides = [1, 1, 1, 1, 1]} : vector<1x4x8x8x4xbf16> to vector<1x1x8x8x4xbf16>
    %3 = vector.shape_cast %2 : vector<1x1x8x8x4xbf16> to vector<1x8x8x4xbf16>
    %4 = vector.extract_strided_slice %1 {offsets = [0, 1, 0, 0, 0], sizes = [1, 1, 8, 8, 4], strides = [1, 1, 1, 1, 1]} : vector<1x4x8x8x4xbf16> to vector<1x1x8x8x4xbf16>
    %5 = vector.shape_cast %4 : vector<1x1x8x8x4xbf16> to vector<1x8x8x4xbf16>
    %6 = arith.maximumf %3, %5 : vector<1x8x8x4xbf16>
    %7 = vector.extract_strided_slice %1 {offsets = [0, 2, 0, 0, 0], sizes = [1, 1, 8, 8, 4], strides = [1, 1, 1, 1, 1]} : vector<1x4x8x8x4xbf16> to vector<1x1x8x8x4xbf16>
    %8 = vector.shape_cast %7 : vector<1x1x8x8x4xbf16> to vector<1x8x8x4xbf16>
    %9 = vector.extract_strided_slice %1 {offsets = [0, 3, 0, 0, 0], sizes = [1, 1, 8, 8, 4], strides = [1, 1, 1, 1, 1]} : vector<1x4x8x8x4xbf16> to vector<1x1x8x8x4xbf16>
    %10 = vector.shape_cast %9 : vector<1x1x8x8x4xbf16> to vector<1x8x8x4xbf16>
    %11 = arith.maximumf %8, %10 : vector<1x8x8x4xbf16>
    %12 = arith.maximumf %6, %11 : vector<1x8x8x4xbf16>
    %13 = tpu.iota {dimensions = array<i32: 0>} : vector<64x1xi32>
    %c8_i32 = arith.constant 8 : i32
    %c0_i32 = arith.constant 0 : i32
    %14 = arith.cmpi eq, %c8_i32, %c0_i32 : i32
    %c1_i32 = arith.constant 1 : i32
    %15 = arith.select %14, %c1_i32, %c8_i32 : i32
    %16 = vector.broadcast %15 : i32 to vector<64x1xi32>
    %17 = arith.remsi %13, %16 : vector<64x1xi32>
    %c0_i32_3 = arith.constant 0 : i32
    %18 = vector.broadcast %c0_i32_3 : i32 to vector<64x1xi32>
    %19 = arith.cmpi ne, %17, %18 : vector<64x1xi32>
    %c0_i32_4 = arith.constant 0 : i32
    %20 = vector.broadcast %c0_i32_4 : i32 to vector<64x1xi32>
    %21 = arith.cmpi slt, %17, %20 : vector<64x1xi32>
    %c0_i32_5 = arith.constant 0 : i32
    %22 = arith.cmpi slt, %15, %c0_i32_5 : i32
    %23 = vector.broadcast %22 : i1 to vector<64x1xi1>
    %24 = vector.broadcast %23 : vector<64x1xi1> to vector<64x1xi1>
    %25 = arith.xori %21, %24 : vector<64x1xi1>
    %26 = arith.andi %25, %19 : vector<64x1xi1>
    %27 = vector.broadcast %15 : i32 to vector<64x1xi32>
    %28 = arith.addi %17, %27 : vector<64x1xi32>
    %29 = arith.select %26, %28, %17 : vector<64x1xi1>, vector<64x1xi32>
    %c1_i32_6 = arith.constant 1 : i32
    %30 = vector.broadcast %c1_i32_6 : i32 to vector<64x1xi32>
    %31 = arith.cmpi sge, %29, %30 : vector<64x1xi32>
    %c7_i32 = arith.constant 7 : i32
    %32 = vector.broadcast %c7_i32 : i32 to vector<64x1xi32>
    %33 = arith.cmpi slt, %29, %32 : vector<64x1xi32>
    %cst = arith.constant 0.000000e+00 : bf16
    %34 = vector.broadcast %cst : bf16 to vector<1x1x8x4xbf16>
    %35 = vector.extract_strided_slice %12 {offsets = [0, 0, 0, 0], sizes = [1, 7, 8, 4], strides = [1, 1, 1, 1]} : vector<1x8x8x4xbf16> to vector<1x7x8x4xbf16>
    %36 = tpu.concatenate %34, %35 in 1 : vector<1x1x8x4xbf16>, vector<1x7x8x4xbf16> -> vector<1x8x8x4xbf16>
    %37 = vector.extract_strided_slice %12 {offsets = [0, 1, 0, 0], sizes = [1, 7, 8, 4], strides = [1, 1, 1, 1]} : vector<1x8x8x4xbf16> to vector<1x7x8x4xbf16>
    %38 = tpu.concatenate %37, %34 in 1 : vector<1x7x8x4xbf16>, vector<1x1x8x4xbf16> -> vector<1x8x8x4xbf16>
    %39 = tpu.concatenate %36, %12, %38 in 3 : vector<1x8x8x4xbf16>, vector<1x8x8x4xbf16>, vector<1x8x8x4xbf16> -> vector<1x8x8x12xbf16>
    %40 = vector.shape_cast %39 : vector<1x8x8x12xbf16> to vector<64x12xbf16>
    %c8 = arith.constant 8 : index
    %c0_7 = arith.constant 0 : index
    %41 = vector.load %arg7[%c8, %c0_7] : memref<80x12xbf16, #tpu.memory_space<vmem>>, vector<64x12xbf16>
    tpu.vector_store %arg7[%c8, %c0_7], %40 {strides = array<i32>} : memref<80x12xbf16, #tpu.memory_space<vmem>>, vector<64x12xbf16>,
    %cst_8 = arith.constant 0.000000e+00 : f32
    %42 = vector.broadcast %cst_8 : f32 to vector<64x8xf32>
    %c7 = arith.constant 7 : index
    %c0_9 = arith.constant 0 : index
    %43 = vector.load %arg7[%c7, %c0_9] : memref<80x12xbf16, #tpu.memory_space<vmem>>, vector<64x12xbf16>
    %cst_10 = arith.constant 0.000000e+00 : bf16
    %44 = vector.broadcast %cst_10 : bf16 to vector<64x12xbf16>
    %45 = vector.shape_cast %31 : vector<64x1xi1> to vector<64x1xi1>
    %46 = vector.broadcast %45 : vector<64x1xi1> to vector<64x12xi1>
    %47 = arith.select %46, %43, %44 : vector<64x12xi1>, vector<64x12xbf16>
    %c0_11 = arith.constant 0 : index
    %c0_12 = arith.constant 0 : index
    %c0_13 = arith.constant 0 : index
    %48 = vector.load %arg2[%c0_11, %c0_12, %c0_13] : memref<3x12x8xbf16, #tpu.memory_space<vmem>>, vector<1x12x8xbf16>
    %49 = vector.shape_cast %48 : vector<1x12x8xbf16> to vector<12x8xbf16>
    %cst_14 = arith.constant dense<0.000000e+00> : vector<64x8xf32>
    %50 = tpu.matmul %47, %49, %cst_14 {dimension_numbers = #tpu.dot_dimension_numbers<[1], [0], [0], [1], [0, 0, 1, 1], [], []>} : vector<64x12xbf16>, vector<12x8xbf16>, vector<64x8xf32> -> vector<64x8xf32>
    %51 = arith.addf %42, %50 : vector<64x8xf32>
    %c8_15 = arith.constant 8 : index
    %c0_16 = arith.constant 0 : index
    %52 = vector.load %arg7[%c8_15, %c0_16] : memref<80x12xbf16, #tpu.memory_space<vmem>>, vector<64x12xbf16>
    %c1 = arith.constant 1 : index
    %c0_17 = arith.constant 0 : index
    %c0_18 = arith.constant 0 : index
    %53 = vector.load %arg2[%c1, %c0_17, %c0_18] : memref<3x12x8xbf16, #tpu.memory_space<vmem>>, vector<1x12x8xbf16>
    %54 = vector.shape_cast %53 : vector<1x12x8xbf16> to vector<12x8xbf16>
    %cst_19 = arith.constant dense<0.000000e+00> : vector<64x8xf32>
    %55 = tpu.matmul %52, %54, %cst_19 {dimension_numbers = #tpu.dot_dimension_numbers<[1], [0], [0], [1], [0, 0, 1, 1], [], []>} : vector<64x12xbf16>, vector<12x8xbf16>, vector<64x8xf32> -> vector<64x8xf32>
    %56 = arith.addf %51, %55 : vector<64x8xf32>
    %c9 = arith.constant 9 : index
    %c0_20 = arith.constant 0 : index
    %57 = vector.load %arg7[%c9, %c0_20] : memref<80x12xbf16, #tpu.memory_space<vmem>>, vector<64x12xbf16>
    %cst_21 = arith.constant 0.000000e+00 : bf16
    %58 = vector.broadcast %cst_21 : bf16 to vector<64x12xbf16>
    %59 = vector.shape_cast %33 : vector<64x1xi1> to vector<64x1xi1>
    %60 = vector.broadcast %59 : vector<64x1xi1> to vector<64x12xi1>
    %61 = arith.select %60, %57, %58 : vector<64x12xi1>, vector<64x12xbf16>
    %c2 = arith.constant 2 : index
    %c0_22 = arith.constant 0 : index
    %c0_23 = arith.constant 0 : index
    %62 = vector.load %arg2[%c2, %c0_22, %c0_23] : memref<3x12x8xbf16, #tpu.memory_space<vmem>>, vector<1x12x8xbf16>
    %63 = vector.shape_cast %62 : vector<1x12x8xbf16> to vector<12x8xbf16>
    %cst_24 = arith.constant dense<0.000000e+00> : vector<64x8xf32>
    %64 = tpu.matmul %61, %63, %cst_24 {dimension_numbers = #tpu.dot_dimension_numbers<[1], [0], [0], [1], [0, 0, 1, 1], [], []>} : vector<64x12xbf16>, vector<12x8xbf16>, vector<64x8xf32> -> vector<64x8xf32>
    %65 = arith.addf %56, %64 : vector<64x8xf32>
    %c0_25 = arith.constant 0 : index
    %c0_26 = arith.constant 0 : index
    %66 = vector.load %arg3[%c0_25, %c0_26] : memref<1x8xf32, #tpu.memory_space<vmem>>, vector<1x8xf32>
    %67 = vector.broadcast %66 : vector<1x8xf32> to vector<64x8xf32>
    %68 = arith.addf %65, %67 : vector<64x8xf32>
    %cst_27 = arith.constant 0.000000e+00 : f32
    %69 = vector.broadcast %cst_27 : f32 to vector<64x8xf32>
    %70 = arith.maximumf %68, %69 : vector<64x8xf32>
    %71 = vector.shape_cast %70 : vector<64x8xf32> to vector<1x8x8x8xf32>
    %72 = arith.truncf %71 : vector<1x8x8x8xf32> to vector<1x8x8x8xbf16>
    %cst_28 = arith.constant 0.000000e+00 : bf16
    %73 = vector.broadcast %cst_28 : bf16 to vector<1x1x8x8xbf16>
    %74 = vector.extract_strided_slice %72 {offsets = [0, 0, 0, 0], sizes = [1, 7, 8, 8], strides = [1, 1, 1, 1]} : vector<1x8x8x8xbf16> to vector<1x7x8x8xbf16>
    %75 = tpu.concatenate %73, %74 in 1 : vector<1x1x8x8xbf16>, vector<1x7x8x8xbf16> -> vector<1x8x8x8xbf16>
    %76 = vector.extract_strided_slice %72 {offsets = [0, 1, 0, 0], sizes = [1, 7, 8, 8], strides = [1, 1, 1, 1]} : vector<1x8x8x8xbf16> to vector<1x7x8x8xbf16>
    %77 = tpu.concatenate %76, %73 in 1 : vector<1x7x8x8xbf16>, vector<1x1x8x8xbf16> -> vector<1x8x8x8xbf16>
    %78 = tpu.concatenate %75, %72, %77 in 3 : vector<1x8x8x8xbf16>, vector<1x8x8x8xbf16>, vector<1x8x8x8xbf16> -> vector<1x8x8x24xbf16>
    %79 = vector.shape_cast %78 : vector<1x8x8x24xbf16> to vector<64x24xbf16>
    %c8_29 = arith.constant 8 : index
    %c0_30 = arith.constant 0 : index
    %80 = vector.load %arg8[%c8_29, %c0_30] : memref<80x24xbf16, #tpu.memory_space<vmem>>, vector<64x24xbf16>
    tpu.vector_store %arg8[%c8_29, %c0_30], %79 {strides = array<i32>} : memref<80x24xbf16, #tpu.memory_space<vmem>>, vector<64x24xbf16>,
    %cst_31 = arith.constant 0.000000e+00 : f32
    %81 = vector.broadcast %cst_31 : f32 to vector<64x8xf32>
    %c7_32 = arith.constant 7 : index
    %c0_33 = arith.constant 0 : index
    %82 = vector.load %arg8[%c7_32, %c0_33] : memref<80x24xbf16, #tpu.memory_space<vmem>>, vector<64x24xbf16>
    %cst_34 = arith.constant 0.000000e+00 : bf16
    %83 = vector.broadcast %cst_34 : bf16 to vector<64x24xbf16>
    %84 = vector.shape_cast %31 : vector<64x1xi1> to vector<64x1xi1>
    %85 = vector.broadcast %84 : vector<64x1xi1> to vector<64x24xi1>
    %86 = arith.select %85, %82, %83 : vector<64x24xi1>, vector<64x24xbf16>
    %c0_35 = arith.constant 0 : index
    %c0_36 = arith.constant 0 : index
    %c0_37 = arith.constant 0 : index
    %87 = vector.load %arg4[%c0_35, %c0_36, %c0_37] : memref<3x24x8xbf16, #tpu.memory_space<vmem>>, vector<1x24x8xbf16>
    %88 = vector.shape_cast %87 : vector<1x24x8xbf16> to vector<24x8xbf16>
    %cst_38 = arith.constant dense<0.000000e+00> : vector<64x8xf32>
    %89 = tpu.matmul %86, %88, %cst_38 {dimension_numbers = #tpu.dot_dimension_numbers<[1], [0], [0], [1], [0, 0, 1, 1], [], []>} : vector<64x24xbf16>, vector<24x8xbf16>, vector<64x8xf32> -> vector<64x8xf32>
    %90 = arith.addf %81, %89 : vector<64x8xf32>
    %c8_39 = arith.constant 8 : index
    %c0_40 = arith.constant 0 : index
    %91 = vector.load %arg8[%c8_39, %c0_40] : memref<80x24xbf16, #tpu.memory_space<vmem>>, vector<64x24xbf16>
    %c1_41 = arith.constant 1 : index
    %c0_42 = arith.constant 0 : index
    %c0_43 = arith.constant 0 : index
    %92 = vector.load %arg4[%c1_41, %c0_42, %c0_43] : memref<3x24x8xbf16, #tpu.memory_space<vmem>>, vector<1x24x8xbf16>
    %93 = vector.shape_cast %92 : vector<1x24x8xbf16> to vector<24x8xbf16>
    %cst_44 = arith.constant dense<0.000000e+00> : vector<64x8xf32>
    %94 = tpu.matmul %91, %93, %cst_44 {dimension_numbers = #tpu.dot_dimension_numbers<[1], [0], [0], [1], [0, 0, 1, 1], [], []>} : vector<64x24xbf16>, vector<24x8xbf16>, vector<64x8xf32> -> vector<64x8xf32>
    %95 = arith.addf %90, %94 : vector<64x8xf32>
    %c9_45 = arith.constant 9 : index
    %c0_46 = arith.constant 0 : index
    %96 = vector.load %arg8[%c9_45, %c0_46] : memref<80x24xbf16, #tpu.memory_space<vmem>>, vector<64x24xbf16>
    %cst_47 = arith.constant 0.000000e+00 : bf16
    %97 = vector.broadcast %cst_47 : bf16 to vector<64x24xbf16>
    %98 = vector.shape_cast %33 : vector<64x1xi1> to vector<64x1xi1>
    %99 = vector.broadcast %98 : vector<64x1xi1> to vector<64x24xi1>
    %100 = arith.select %99, %96, %97 : vector<64x24xi1>, vector<64x24xbf16>
    %c2_48 = arith.constant 2 : index
    %c0_49 = arith.constant 0 : index
    %c0_50 = arith.constant 0 : index
    %101 = vector.load %arg4[%c2_48, %c0_49, %c0_50] : memref<3x24x8xbf16, #tpu.memory_space<vmem>>, vector<1x24x8xbf16>
    %102 = vector.shape_cast %101 : vector<1x24x8xbf16> to vector<24x8xbf16>
    %cst_51 = arith.constant dense<0.000000e+00> : vector<64x8xf32>
    %103 = tpu.matmul %100, %102, %cst_51 {dimension_numbers = #tpu.dot_dimension_numbers<[1], [0], [0], [1], [0, 0, 1, 1], [], []>} : vector<64x24xbf16>, vector<24x8xbf16>, vector<64x8xf32> -> vector<64x8xf32>
    %104 = arith.addf %95, %103 : vector<64x8xf32>
    %c0_52 = arith.constant 0 : index
    %c0_53 = arith.constant 0 : index
    %105 = vector.load %arg5[%c0_52, %c0_53] : memref<1x8xf32, #tpu.memory_space<vmem>>, vector<1x8xf32>
    %106 = vector.broadcast %105 : vector<1x8xf32> to vector<64x8xf32>
    %107 = arith.addf %104, %106 : vector<64x8xf32>
    %cst_54 = arith.constant 0.000000e+00 : f32
    %108 = vector.broadcast %cst_54 : f32 to vector<64x8xf32>
    %109 = arith.maximumf %107, %108 : vector<64x8xf32>
    %c0_55 = arith.constant 0 : index
    %c0_56 = arith.constant 0 : index
    %110 = vector.load %arg6[%c0_55, %c0_56] : memref<64x8xf32, #tpu.memory_space<vmem>>, vector<64x8xf32>
    tpu.vector_store %arg6[%c0_55, %c0_56], %109 {strides = array<i32>} : memref<64x8xf32, #tpu.memory_space<vmem>>, vector<64x8xf32>,
    return
  }
  func.func @transform_0(%arg0: i32) -> (i32, i32, i32, i32) {
    %c0_i32 = arith.constant 0 : i32
    %c0_i32_0 = arith.constant 0 : i32
    %c0_i32_1 = arith.constant 0 : i32
    %c0_i32_2 = arith.constant 0 : i32
    return %arg0, %c0_i32, %c0_i32_0, %c0_i32_1 : i32, i32, i32, i32
  }
  func.func @transform_1(%arg0: i32) -> (i32, i32, i32) {
    %c0_i32 = arith.constant 0 : i32
    %c0_i32_0 = arith.constant 0 : i32
    %c0_i32_1 = arith.constant 0 : i32
    %c0_i32_2 = arith.constant 0 : i32
    return %c0_i32, %c0_i32_0, %c0_i32_1 : i32, i32, i32
  }
  func.func @transform_2(%arg0: i32) -> (i32, i32) {
    %c0_i32 = arith.constant 0 : i32
    %c0_i32_0 = arith.constant 0 : i32
    %c0_i32_1 = arith.constant 0 : i32
    return %c0_i32, %c0_i32_0 : i32, i32
  }
  func.func @transform_3(%arg0: i32) -> (i32, i32, i32) {
    %c0_i32 = arith.constant 0 : i32
    %c0_i32_0 = arith.constant 0 : i32
    %c0_i32_1 = arith.constant 0 : i32
    %c0_i32_2 = arith.constant 0 : i32
    return %c0_i32, %c0_i32_0, %c0_i32_1 : i32, i32, i32
  }
  func.func @transform_4(%arg0: i32) -> (i32, i32) {
    %c0_i32 = arith.constant 0 : i32
    %c0_i32_0 = arith.constant 0 : i32
    %c0_i32_1 = arith.constant 0 : i32
    return %c0_i32, %c0_i32_0 : i32, i32
  }
  func.func @transform_5(%arg0: i32) -> (i32, i32) {
    %c0_i32 = arith.constant 0 : i32
    %c0_i32_0 = arith.constant 0 : i32
    return %arg0, %c0_i32 : i32, i32
  }
}

</mosaic_0001>

<llo_original>
// kernel: down_forward.1
$region0: #{down_forward.1}
  #allocation0 [shape = 'u32[]', space=smem, size = 0x4, offset = 0x4, fixed_abs, tag = 'smem constant byte address 0x4 - core index']
  #allocation1 [shape = 'u32[144,128]{1,0:T(1,128)}', space=vmem, size = 0x12000, scoped, tag = 'internal scratch']
  #allocation2 [shape = 'bf16[80,12]{1,0:T(8,128)(2,1)}', space=vmem, size = 0x5000, scoped, tag = 'scratch operand']
  #allocation3 [shape = 'bf16[80,24]{1,0:T(8,128)(2,1)}', space=vmem, size = 0x5000, scoped, tag = 'scratch operand']
  %s0 = inlined_call_operand.vmem [shape: bf16[8,8,8,4], index: 0, kind: input, shape index: {}]
  %s1 = inlined_call_operand.vmem [shape: bf16[3,12,8], index: 1, kind: input, shape index: {}]
  %s2 = inlined_call_operand.vmem [shape: f32[1,8], index: 2, kind: input, shape index: {}]
  %s3 = inlined_call_operand.vmem [shape: bf16[3,24,8], index: 3, kind: input, shape index: {}]
  %s4 = inlined_call_operand.vmem [shape: f32[1,8], index: 4, kind: input, shape index: {}]
  %s5 = inlined_call_operand.vmem [shape: f32[128,8], index: 5, kind: output, shape index: {}]
  %s6 = sld [smem:[#allocation0]]
  $region53: #{down_forward.1} parent=0
    _
  %s8 = ssub.s32 1, %s6
  %s9 = scalar_select 0, %s8, %s6
  loop: start=0, step=1, limit=4
  $region2: #{down_forward.1} parent=0 // loop_pre_header
    _
  $region3: #{down_forward.1} parent=0 // loop_header
    %s11 = sphi 0, %s15
    %p12 = scmp.ge.s32.totalorder %s11, 4
    %s21 = sphi 0, %s23
    %s24 = sphi 0, %s21
    %s25 = sphi 0, %s24
    %s41 = sphi 0, %s25
    %s45 = sphi 0, %s45
    %s47 = sphi 0, %s45
    %s48 = sphi 0, %s47
    %s62 = sphi 0, %s48
    %s66 = sphi 0, %s66
    %s68 = sphi 0, %s66
    %s69 = sphi 0, %s68
    %s83 = sphi 0, %s69
    %s87 = sphi 0, %s87
    %s89 = sphi 0, %s87
    %s90 = sphi 0, %s89
    %s104 = sphi 0, %s90
    %s108 = sphi 0, %s108
    %s110 = sphi 0, %s108
    %s111 = sphi 0, %s110
    %s125 = sphi 0, %s111
    %s131 = sphi 0, %s133
    %s134 = sphi 0, %s131
    %s135 = sphi 0, %s134
    %s151 = sphi 0, %s135
  $region4: #{down_forward.1} parent=0 // loop_header_branch
    %14 = sbr.rel (%p12) target = $region8
  $region5: #{down_forward.1} parent=0 // loop_body
    %s16 = ssub.s32 %s11, 1
    %s17 = ssub.s32 %s11, 2
    %s18 = sadd.s32 %s11, 1
    %s19 = ssub.s32 %s11, %s18
    %p20 = scmp.eq.s32.totalorder %s19, 0
    %s22 = sadd.s32 %s21, 1
    %s23 = scalar_select %p20, %s21, %s22
    %p26 = pneg %p20
    %p27 = scmp.eq.s32.totalorder %s11, 1
    %p28 = por %p26, %p27
    %p29 = scmp.ne.s32.totalorder %s21, %s24
    %p30 = scmp.eq.s32.totalorder %s11, 0
    %p31 = por %p29, %p30
    %p32 = scmp.ne.s32.totalorder %s21, %s24
    %p33 = scmp.eq.s32.totalorder %s16, 1
    %p34 = por %p32, %p33
    %p35 = scmp.ne.s32.totalorder %s24, %s25
    %p36 = scmp.eq.s32.totalorder %s16, 0
    %p37 = por %p35, %p36
    %p38 = scmp.ne.s32.totalorder %s24, %s25
    %p39 = scmp.eq.s32.totalorder %s17, 1
    %p40 = por %p38, %p39
    %p42 = scmp.ne.s32.totalorder %s25, %s41
    %p43 = scmp.eq.s32.totalorder %s17, 0
    %p44 = por %p42, %p43
    %s46 = sadd.s32 %s45, 1
    %p49 = scmp.eq.s32.totalorder %s11, 1
    %p50 = scmp.ne.s32.totalorder %s45, %s47
    %p51 = scmp.eq.s32.totalorder %s11, 0
    %p52 = por %p50, %p51
    %p53 = scmp.ne.s32.totalorder %s45, %s47
    %p54 = scmp.eq.s32.totalorder %s16, 1
    %p55 = por %p53, %p54
    %p56 = scmp.ne.s32.totalorder %s47, %s48
    %p57 = scmp.eq.s32.totalorder %s16, 0
    %p58 = por %p56, %p57
    %p59 = scmp.ne.s32.totalorder %s47, %s48
    %p60 = scmp.eq.s32.totalorder %s17, 1
    %p61 = por %p59, %p60
    %p63 = scmp.ne.s32.totalorder %s48, %s62
    %p64 = scmp.eq.s32.totalorder %s17, 0
    %p65 = por %p63, %p64
    %s67 = sadd.s32 %s66, 1
    %p70 = scmp.eq.s32.totalorder %s11, 1
    %p71 = scmp.ne.s32.totalorder %s66, %s68
    %p72 = scmp.eq.s32.totalorder %s11, 0
    %p73 = por %p71, %p72
    %p74 = scmp.ne.s32.totalorder %s66, %s68
    %p75 = scmp.eq.s32.totalorder %s16, 1
    %p76 = por %p74, %p75
    %p77 = scmp.ne.s32.totalorder %s68, %s69
    %p78 = scmp.eq.s32.totalorder %s16, 0
    %p79 = por %p77, %p78
    %p80 = scmp.ne.s32.totalorder %s68, %s69
    %p81 = scmp.eq.s32.totalorder %s17, 1
    %p82 = por %p80, %p81
    %p84 = scmp.ne.s32.totalorder %s69, %s83
    %p85 = scmp.eq.s32.totalorder %s17, 0
    %p86 = por %p84, %p85
    %s88 = sadd.s32 %s87, 1
    %p91 = scmp.eq.s32.totalorder %s11, 1
    %p92 = scmp.ne.s32.totalorder %s87, %s89
    %p93 = scmp.eq.s32.totalorder %s11, 0
    %p94 = por %p92, %p93
    %p95 = scmp.ne.s32.totalorder %s87, %s89
    %p96 = scmp.eq.s32.totalorder %s16, 1
    %p97 = por %p95, %p96
    %p98 = scmp.ne.s32.totalorder %s89, %s90
    %p99 = scmp.eq.s32.totalorder %s16, 0
    %p100 = por %p98, %p99
    %p101 = scmp.ne.s32.totalorder %s89, %s90
    %p102 = scmp.eq.s32.totalorder %s17, 1
    %p103 = por %p101, %p102
    %p105 = scmp.ne.s32.totalorder %s90, %s104
    %p106 = scmp.eq.s32.totalorder %s17, 0
    %p107 = por %p105, %p106
    %s109 = sadd.s32 %s108, 1
    %p112 = scmp.eq.s32.totalorder %s11, 1
    %p113 = scmp.ne.s32.totalorder %s108, %s110
    %p114 = scmp.eq.s32.totalorder %s11, 0
    %p115 = por %p113, %p114
    %p116 = scmp.ne.s32.totalorder %s108, %s110
    %p117 = scmp.eq.s32.totalorder %s16, 1
    %p118 = por %p116, %p117
    %p119 = scmp.ne.s32.totalorder %s110, %s111
    %p120 = scmp.eq.s32.totalorder %s16, 0
    %p121 = por %p119, %p120
    %p122 = scmp.ne.s32.totalorder %s110, %s111
    %p123 = scmp.eq.s32.totalorder %s17, 1
    %p124 = por %p122, %p123
    %p126 = scmp.ne.s32.totalorder %s111, %s125
    %p127 = scmp.eq.s32.totalorder %s17, 0
    %p128 = por %p126, %p127
    %s129 = ssub.s32 %s11, %s18
    %p130 = scmp.eq.s32.totalorder %s129, 0
    %s132 = sadd.s32 %s131, 1
    %s133 = scalar_select %p130, %s131, %s132
    %p136 = pneg %p130
    %p137 = scmp.eq.s32.totalorder %s11, 1
    %p138 = por %p136, %p137
    %p139 = scmp.ne.s32.totalorder %s131, %s134
    %p140 = scmp.eq.s32.totalorder %s11, 0
    %p141 = por %p139, %p140
    %p142 = scmp.ne.s32.totalorder %s131, %s134
    %p143 = scmp.eq.s32.totalorder %s16, 1
    %p144 = por %p142, %p143
    %p145 = scmp.ne.s32.totalorder %s134, %s135
    %p146 = scmp.eq.s32.totalorder %s16, 0
    %p147 = por %p145, %p146
    %p148 = scmp.ne.s32.totalorder %s134, %s135
    %p149 = scmp.eq.s32.totalorder %s17, 1
    %p150 = por %p148, %p149
    %p152 = scmp.ne.s32.totalorder %s135, %s151
    %p153 = scmp.eq.s32.totalorder %s17, 0
    %p154 = por %p152, %p153
    %p155 = scmp.le.s32.totalorder 1, %s11
    %p156 = scmp.lt.s32.totalorder %s11, 3
    %p157 = pnand %p155, %p156
    %p158 = pneg %p157
    // Predicated region
    $region9: #{down_forward.1} parent=5 // pred_check
      _
    $region10: #{down_forward.1} parent=5 // pred_check_branch
      %160 = sbr.rel (%p157) target = $region12
    $region11: #{down_forward.1} parent=5 // pred_region
      %s161 = ssub.s32 %s11, 1
      // Predicated region
      $region13: #{down_forward.1} parent=11 // pred_check
        %p162 = pneg %p58
      $region14: #{down_forward.1} parent=11 // pred_check_branch
        %164 = sbr.rel (%p162) target = $region16
      $region15: #{down_forward.1} parent=11 // pred_region
        _
      $region16: #{down_forward.1} parent=11 // pred_fallthru
        _
      // Predicated region
      $region17: #{down_forward.1} parent=11 // pred_check
        %p165 = pneg %p79
      $region18: #{down_forward.1} parent=11 // pred_check_branch
        %167 = sbr.rel (%p165) target = $region20
      $region19: #{down_forward.1} parent=11 // pred_region
        _
      $region20: #{down_forward.1} parent=11 // pred_fallthru
        _
      // Predicated region
      $region21: #{down_forward.1} parent=11 // pred_check
        %p168 = pneg %p100
      $region22: #{down_forward.1} parent=11 // pred_check_branch
        %170 = sbr.rel (%p168) target = $region24
      $region23: #{down_forward.1} parent=11 // pred_region
        _
      $region24: #{down_forward.1} parent=11 // pred_fallthru
        _
      // Predicated region
      $region25: #{down_forward.1} parent=11 // pred_check
        %p171 = pneg %p121
      $region26: #{down_forward.1} parent=11 // pred_check_branch
        %173 = sbr.rel (%p171) target = $region28
      $region27: #{down_forward.1} parent=11 // pred_region
        _
      $region28: #{down_forward.1} parent=11 // pred_fallthru
        _
    $region12: #{down_forward.1} parent=5 // pred_fallthru
      _
    %p174 = scmp.lt.s32.totalorder %s11, 2
    // Predicated region
    $region29: #{down_forward.1} parent=5 // pred_check
      %p175 = pneg %p174
    $region30: #{down_forward.1} parent=5 // pred_check_branch
      %177 = sbr.rel (%p175) target = $region32
    $region31: #{down_forward.1} parent=5 // pred_region
      // Predicated region
      $region33: #{down_forward.1} parent=31 // pred_check
        %p178 = pneg %p31
      $region34: #{down_forward.1} parent=31 // pred_check_branch
        %180 = sbr.rel (%p178) target = $region36
      $region35: #{down_forward.1} parent=31 // pred_region
        %s181 = smul.u32 4, %s11
        %p182 = scmp.lt.s32.totalorder %s181, 7
        %s183 = scalar_select %p182, %s181, 7
        %s184 = smul.addr %s183, 8
        %s185 = smul.addr %s184, 4
        %s186 = scalar_lea.vmem %s0, %s185
        %s187 = smul.u32 4, %s11
      $region36: #{down_forward.1} parent=31 // pred_fallthru
        _
    $region32: #{down_forward.1} parent=5 // pred_fallthru
      _
    %p188 = scmp.le.s32.totalorder 1, %s11
    %p189 = scmp.lt.s32.totalorder %s11, 3
    %p190 = pnand %p188, %p189
    %p191 = pneg %p190
    // Predicated region
    $region37: #{down_forward.1} parent=5 // pred_check
      _
    $region38: #{down_forward.1} parent=5 // pred_check_branch
      %193 = sbr.rel (%p190) target = $region40
    $region39: #{down_forward.1} parent=5 // pred_region
      %s194 = ssub.s32 %s11, 1
      %s195 = smul.u32 4, %s16
      %p196 = scmp.lt.s32.totalorder %s195, 7
      %s197 = scalar_select %p196, %s195, 7
      %s198 = smul.addr %s197, 8
      %s199 = smul.addr %s198, 4
      %s200 = scalar_lea.vmem %s0, %s199
      %p201 = pneg %p37
      %p202 = pneg %p34
      %p203 = pneg %p58
      %p204 = pneg %p55
      %p205 = pneg %p79
      %p206 = pneg %p76
      %p207 = pneg %p100
      %p208 = pneg %p97
      %p209 = pneg %p121
      %p210 = pneg %p118
      %p211 = pneg %p147
      %p212 = pneg %p144
      %s213 = smul.u32 8, %s16
      %p214 = scmp.lt.s32.totalorder %s213, 15
      %s215 = scalar_select %p214, %s213, 15
      %s216 = smul.addr %s215, 8
      %s217 = scalar_lea.vmem %s5, %s216
      %s218 = smul.u32 4, %s16
      %p219 = scmp.lt.s32.totalorder %s218, 7
      %s220 = scalar_select %p219, %s218, 7
      %s221 = smul.addr %s220, 8
      %s222 = smul.addr %s221, 4
      %s223 = scalar_lea.vmem %s0, %s222
      %s224 = smul.u32 4, %s16
      %s225 = smul.u32 8, %s16
      %p226 = scmp.lt.s32.totalorder %s225, 15
      %s227 = scalar_select %p226, %s225, 15
      %s228 = smul.addr %s227, 8
      %s229 = scalar_lea.vmem %s5, %s228
      %s230 = smul.u32 8, %s16
      %v234 = vld [vmem:[%s223] sm:$0xf]
      %v235 = vld [vmem:[%s223 + $0x4] sm:$0xf]
      %v236 = vld [vmem:[%s223 + $0x8] sm:$0xf]
      %v237 = vld [vmem:[%s223 + $0xc] sm:$0xf]
      %v238 = vld [vmem:[%s223 + $0x10] sm:$0xf]
      %v239 = vld [vmem:[%s223 + $0x14] sm:$0xf]
      %v240 = vld [vmem:[%s223 + $0x18] sm:$0xf]
      %v241 = vld [vmem:[%s223 + $0x1c] sm:$0xf]
      %v242 = vld [vmem:[%s223 + $0x20] sm:$0xf]
      %v243 = vld [vmem:[%s223 + $0x24] sm:$0xf]
      %v244 = vld [vmem:[%s223 + $0x28] sm:$0xf]
      %v245 = vld [vmem:[%s223 + $0x2c] sm:$0xf]
      %v246 = vld [vmem:[%s223 + $0x30] sm:$0xf]
      %v247 = vld [vmem:[%s223 + $0x34] sm:$0xf]
      %v248 = vld [vmem:[%s223 + $0x38] sm:$0xf]
      %v249 = vld [vmem:[%s223 + $0x3c] sm:$0xf]
      %v250 = vld [vmem:[%s223 + $0x40] sm:$0xf]
      %v251 = vld [vmem:[%s223 + $0x44] sm:$0xf]
      %v252 = vld [vmem:[%s223 + $0x48] sm:$0xf]
      %v253 = vld [vmem:[%s223 + $0x4c] sm:$0xf]
      %v254 = vld [vmem:[%s223 + $0x50] sm:$0xf]
      %v255 = vld [vmem:[%s223 + $0x54] sm:$0xf]
      %v256 = vld [vmem:[%s223 + $0x58] sm:$0xf]
      %v257 = vld [vmem:[%s223 + $0x5c] sm:$0xf]
      %v258 = vld [vmem:[%s223 + $0x60] sm:$0xf]
      %v259 = vld [vmem:[%s223 + $0x64] sm:$0xf]
      %v260 = vld [vmem:[%s223 + $0x68] sm:$0xf]
      %v261 = vld [vmem:[%s223 + $0x6c] sm:$0xf]
      %v262 = vld [vmem:[%s223 + $0x70] sm:$0xf]
      %v263 = vld [vmem:[%s223 + $0x74] sm:$0xf]
      %v264 = vld [vmem:[%s223 + $0x78] sm:$0xf]
      %v265 = vld [vmem:[%s223 + $0x7c] sm:$0xf]
      %v266 = vmax.bf16 %v234, %v242
      %v267 = vmax.bf16 %v235, %v243
      %v268 = vmax.bf16 %v236, %v244
      %v269 = vmax.bf16 %v237, %v245
      %v270 = vmax.bf16 %v238, %v246
      %v271 = vmax.bf16 %v239, %v247
      %v272 = vmax.bf16 %v240, %v248
      %v273 = vmax.bf16 %v241, %v249
      %v274 = vmax.bf16 %v250, %v258
      %v275 = vmax.bf16 %v251, %v259
      %v276 = vmax.bf16 %v252, %v260
      %v277 = vmax.bf16 %v253, %v261
      %v278 = vmax.bf16 %v254, %v262
      %v279 = vmax.bf16 %v255, %v263
      %v280 = vmax.bf16 %v256, %v264
      %v281 = vmax.bf16 %v257, %v265
      %v282 = vmax.bf16 %v266, %v274
      %v283 = vmax.bf16 %v267, %v275
      %v284 = vmax.bf16 %v268, %v276
      %v285 = vmax.bf16 %v269, %v277
      %v286 = vmax.bf16 %v270, %v278
      %v287 = vmax.bf16 %v271, %v279
      %v288 = vmax.bf16 %v272, %v280
      %v289 = vmax.bf16 %v273, %v281
      %v290 = vlaneseq
      %v291 = vshrl.u32 %v290, 7
      %v292 = vadd.s32 %v291, 8
      %v293 = vadd.s32 %v291, 16
      %v294 = vadd.s32 %v291, 24
      %v295 = vadd.s32 %v291, 32
      %v296 = vadd.s32 %v291, 40
      %v297 = vadd.s32 %v291, 48
      %v298 = vadd.s32 %v291, 56
      %vm299 = vcmp.lt.s32.totalorder %v291, 0
      %v300 = vsub.s32 0, %v291
      %v301 = vsel %vm299, %v300, %v291
      %v302 = vshrl.u32 %v301, 3
      %v303 = vand.u32 %v301, 7
      %v304 = vsub.s32 0, %v303
      %v305 = vsel %vm299, %v304, %v303
      %vm306 = vcmp.lt.s32.totalorder %v292, 0
      %v307 = vsub.s32 0, %v292
      %v308 = vsel %vm306, %v307, %v292
      %v309 = vshrl.u32 %v308, 3
      %v310 = vand.u32 %v308, 7
      %v311 = vsub.s32 0, %v310
      %v312 = vsel %vm306, %v311, %v310
      %vm313 = vcmp.lt.s32.totalorder %v293, 0
      %v314 = vsub.s32 0, %v293
      %v315 = vsel %vm313, %v314, %v293
      %v316 = vshrl.u32 %v315, 3
      %v317 = vand.u32 %v315, 7
      %v318 = vsub.s32 0, %v317
      %v319 = vsel %vm313, %v318, %v317
      %vm320 = vcmp.lt.s32.totalorder %v294, 0
      %v321 = vsub.s32 0, %v294
      %v322 = vsel %vm320, %v321, %v294
      %v323 = vshrl.u32 %v322, 3
      %v324 = vand.u32 %v322, 7
      %v325 = vsub.s32 0, %v324
      %v326 = vsel %vm320, %v325, %v324
      %vm327 = vcmp.lt.s32.totalorder %v295, 0
      %v328 = vsub.s32 0, %v295
      %v329 = vsel %vm327, %v328, %v295
      %v330 = vshrl.u32 %v329, 3
      %v331 = vand.u32 %v329, 7
      %v332 = vsub.s32 0, %v331
      %v333 = vsel %vm327, %v332, %v331
      %vm334 = vcmp.lt.s32.totalorder %v296, 0
      %v335 = vsub.s32 0, %v296
      %v336 = vsel %vm334, %v335, %v296
      %v337 = vshrl.u32 %v336, 3
      %v338 = vand.u32 %v336, 7
      %v339 = vsub.s32 0, %v338
      %v340 = vsel %vm334, %v339, %v338
      %vm341 = vcmp.lt.s32.totalorder %v297, 0
      %v342 = vsub.s32 0, %v297
      %v343 = vsel %vm341, %v342, %v297
      %v344 = vshrl.u32 %v343, 3
      %v345 = vand.u32 %v343, 7
      %v346 = vsub.s32 0, %v345
      %v347 = vsel %vm341, %v346, %v345
      %vm348 = vcmp.lt.s32.totalorder %v298, 0
      %v349 = vsub.s32 0, %v298
      %v350 = vsel %vm348, %v349, %v298
      %v351 = vshrl.u32 %v350, 3
      %v352 = vand.u32 %v350, 7
      %v353 = vsub.s32 0, %v352
      %v354 = vsel %vm348, %v353, %v352
      %vm355 = vcmp.ne.s32.totalorder %v305, 0
      %vm356 = vcmp.ne.s32.totalorder %v312, 0
      %vm357 = vcmp.ne.s32.totalorder %v319, 0
      %vm358 = vcmp.ne.s32.totalorder %v326, 0
      %vm359 = vcmp.ne.s32.totalorder %v333, 0
      %vm360 = vcmp.ne.s32.totalorder %v340, 0
      %vm361 = vcmp.ne.s32.totalorder %v347, 0
      %vm362 = vcmp.ne.s32.totalorder %v354, 0
      %vm363 = vcmp.lt.s32.totalorder %v305, 0
      %vm364 = vcmp.lt.s32.totalorder %v312, 0
      %vm365 = vcmp.lt.s32.totalorder %v319, 0
      %vm366 = vcmp.lt.s32.totalorder %v326, 0
      %vm367 = vcmp.lt.s32.totalorder %v333, 0
      %vm368 = vcmp.lt.s32.totalorder %v340, 0
      %vm369 = vcmp.lt.s32.totalorder %v347, 0
      %vm370 = vcmp.lt.s32.totalorder %v354, 0
      %vm371 = vmand %vm363, %vm355
      %vm372 = vmand %vm364, %vm356
      %vm373 = vmand %vm365, %vm357
      %vm374 = vmand %vm366, %vm358
      %vm375 = vmand %vm367, %vm359
      %vm376 = vmand %vm368, %vm360
      %vm377 = vmand %vm369, %vm361
      %vm378 = vmand %vm370, %vm362
      %v379 = vadd.s32 %v305, 8
      %v380 = vadd.s32 %v312, 8
      %v381 = vadd.s32 %v319, 8
      %v382 = vadd.s32 %v326, 8
      %v383 = vadd.s32 %v333, 8
      %v384 = vadd.s32 %v340, 8
      %v385 = vadd.s32 %v347, 8
      %v386 = vadd.s32 %v354, 8
      %v387 = vsel %vm371, %v379, %v305
      %v388 = vsel %vm372, %v380, %v312
      %v389 = vsel %vm373, %v381, %v319
      %v390 = vsel %vm374, %v382, %v326
      %v391 = vsel %vm375, %v383, %v333
      %v392 = vsel %vm376, %v384, %v340
      %v393 = vsel %vm377, %v385, %v347
      %v394 = vsel %vm378, %v386, %v354
      %vm395 = vcmp.ge.s32.totalorder %v387, 1
      %vm396 = vcmp.ge.s32.totalorder %v388, 1
      %vm397 = vcmp.ge.s32.totalorder %v389, 1
      %vm398 = vcmp.ge.s32.totalorder %v390, 1
      %vm399 = vcmp.ge.s32.totalorder %v391, 1
      %vm400 = vcmp.ge.s32.totalorder %v392, 1
      %vm401 = vcmp.ge.s32.totalorder %v393, 1
      %vm402 = vcmp.ge.s32.totalorder %v394, 1
      %vm403 = vcmp.lt.s32.totalorder %v387, 7
      %vm404 = vcmp.lt.s32.totalorder %v388, 7
      %vm405 = vcmp.lt.s32.totalorder %v389, 7
      %vm406 = vcmp.lt.s32.totalorder %v390, 7
      %vm407 = vcmp.lt.s32.totalorder %v391, 7
      %vm408 = vcmp.lt.s32.totalorder %v392, 7
      %vm409 = vcmp.lt.s32.totalorder %v393, 7
      %vm410 = vcmp.lt.s32.totalorder %v394, 7
      %v419 = vunpack.c.l.b16 %v282
      %v420 = vunpack.c.l.b16 %v283
      %v421 = vunpack.c.l.b16 %v284
      %v422 = vunpack.c.l.b16 %v285
      %v423 = vunpack.c.l.b16 %v286
      %v424 = vunpack.c.l.b16 %v287
      %v425 = vunpack.c.l.b16 %v288
      %v426 = vunpack.c.l.b16 %v289
      %v427 = vpack.c.b16 %v419, %v419
      %v428 = vpack.c.b16 %v420, %v420
      %v429 = vpack.c.b16 %v421, %v421
      %v430 = vpack.c.b16 %v422, %v422
      %v431 = vpack.c.b16 %v423, %v423
      %v432 = vpack.c.b16 %v424, %v424
      %v433 = vpack.c.b16 %v425, %v425
      %v434 = vpack.c.b16 %v426, %v426
      %435 = vrot.lane.b32.xlu0 %v427, 4
      %v436 = vpop.permute.xlu0 %435
      %437 = vrot.lane.b32.xlu0 %v428, 4
      %v438 = vpop.permute.xlu0 %437
      %439 = vrot.lane.b32.xlu0 %v429, 4
      %v440 = vpop.permute.xlu0 %439
      %441 = vrot.lane.b32.xlu0 %v430, 4
      %v442 = vpop.permute.xlu0 %441
      %443 = vrot.lane.b32.xlu0 %v431, 4
      %v444 = vpop.permute.xlu0 %443
      %445 = vrot.lane.b32.xlu0 %v432, 4
      %v446 = vpop.permute.xlu0 %445
      %447 = vrot.lane.b32.xlu0 %v433, 4
      %v448 = vpop.permute.xlu0 %447
      %449 = vrot.lane.b32.xlu0 %v434, 4
      %v450 = vpop.permute.xlu0 %449
      %v452 = vunpack.c.l.b16 0
      %v453 = vpack.c.b16 %v452, %v452
      %454 = vrot.lane.b32.xlu0 %v428, 8
      %v455 = vpop.permute.xlu0 %454
      %456 = vrot.lane.b32.xlu0 %v429, 8
      %v457 = vpop.permute.xlu0 %456
      %458 = vrot.lane.b32.xlu0 %v430, 8
      %v459 = vpop.permute.xlu0 %458
      %460 = vrot.lane.b32.xlu0 %v431, 8
      %v461 = vpop.permute.xlu0 %460
      %462 = vrot.lane.b32.xlu0 %v432, 8
      %v463 = vpop.permute.xlu0 %462
      %464 = vrot.lane.b32.xlu0 %v433, 8
      %v465 = vpop.permute.xlu0 %464
      %466 = vrot.lane.b32.xlu0 %v434, 8
      %v467 = vpop.permute.xlu0 %466
      %468 = vrot.lane.b32.xlu0 %v453, 8
      %v469 = vpop.permute.xlu0 %468
      %vm470 = vcmask 31744
      %v473 = vsel %vm470, 0, %v436
      %v476 = vsel %vm470, %v282, %v438
      %v479 = vsel %vm470, %v283, %v440
      %v482 = vsel %vm470, %v284, %v442
      %v485 = vsel %vm470, %v285, %v444
      %v488 = vsel %vm470, %v286, %v446
      %v491 = vsel %vm470, %v287, %v448
      %v494 = vsel %vm470, %v288, %v450
      %vm495 = vcmask 64512
      %v497 = vsel %vm495, %v473, %v455
      %v500 = vsel %vm495, %v476, %v457
      %v503 = vsel %vm495, %v479, %v459
      %v506 = vsel %vm495, %v482, %v461
      %v509 = vsel %vm495, %v485, %v463
      %v512 = vsel %vm495, %v488, %v465
      %v515 = vsel %vm495, %v491, %v467
      %v518 = vsel %vm495, %v494, %v469
      %vm520 = vcmask 93184
      %521 = vst.msk [vmem:[#allocation2 + $0x4] sm:$0xf] %vm520, %v497
      %522 = vst.msk [vmem:[#allocation2 + $0x8] sm:$0xf] %vm520, %v500
      %523 = vst.msk [vmem:[#allocation2 + $0xc] sm:$0xf] %vm520, %v503
      %524 = vst.msk [vmem:[#allocation2 + $0x10] sm:$0xf] %vm520, %v506
      %525 = vst.msk [vmem:[#allocation2 + $0x14] sm:$0xf] %vm520, %v509
      %526 = vst.msk [vmem:[#allocation2 + $0x18] sm:$0xf] %vm520, %v512
      %527 = vst.msk [vmem:[#allocation2 + $0x1c] sm:$0xf] %vm520, %v515
      %528 = vst.msk [vmem:[#allocation2 + $0x20] sm:$0xf] %vm520, %v518
      %v529 = vld [vmem:[#allocation2] sm:$0x8]
      %v530 = vld [vmem:[#allocation2 + $0x4] sm:$0xf]
      %v531 = vld [vmem:[#allocation2 + $0x8] sm:$0xf]
      %v532 = vld [vmem:[#allocation2 + $0xc] sm:$0xf]
      %v533 = vld [vmem:[#allocation2 + $0x10] sm:$0xf]
      %v534 = vld [vmem:[#allocation2 + $0x14] sm:$0xf]
      %v535 = vld [vmem:[#allocation2 + $0x18] sm:$0xf]
      %v536 = vld [vmem:[#allocation2 + $0x1c] sm:$0xf]
      %v537 = vld [vmem:[#allocation2 + $0x20] sm:$0xf]
      %v538 = vsel %vm395, 1, 0
      %v539 = vsel %vm396, 1, 0
      %v540 = vsel %vm397, 1, 0
      %v541 = vsel %vm398, 1, 0
      %v542 = vsel %vm399, 1, 0
      %v543 = vsel %vm400, 1, 0
      %v544 = vsel %vm401, 1, 0
      %v545 = vsel %vm402, 1, 0
      %vm546 = vcmp.eq.s32.totalorder %v538, 1
      %vm547 = vcmp.eq.s32.totalorder %v539, 1
      %vm548 = vcmp.eq.s32.totalorder %v540, 1
      %vm549 = vcmp.eq.s32.totalorder %v541, 1
      %vm550 = vcmp.eq.s32.totalorder %v542, 1
      %vm551 = vcmp.eq.s32.totalorder %v543, 1
      %vm552 = vcmp.eq.s32.totalorder %v544, 1
      %vm553 = vcmp.eq.s32.totalorder %v545, 1
      %vm554 = vmpackc.low %vm546, %vm546
      %vm555 = vmpackc.low %vm547, %vm547
      %vm556 = vmpackc.low %vm548, %vm548
      %vm557 = vmpackc.low %vm549, %vm549
      %vm558 = vmpackc.low %vm550, %vm550
      %vm559 = vmpackc.low %vm551, %vm551
      %vm560 = vmpackc.low %vm552, %vm552
      %vm561 = vmpackc.low %vm553, %vm553
      %v562 = vsel %vm554, 65537, 0
      %v563 = vsel %vm555, 65537, 0
      %v564 = vsel %vm556, 65537, 0
      %v565 = vsel %vm557, 65537, 0
      %v566 = vsel %vm558, 65537, 0
      %v567 = vsel %vm559, 65537, 0
      %v568 = vsel %vm560, 65537, 0
      %v569 = vsel %vm561, 65537, 0
      %vm570 = vsmask.f32 3328
      %vm571 = vsmask.f32 7440
      %vm572 = vmor %vm570, %vm571
      %v574 = vshll.u32 %v562, 16
      %v576 = vrot.slane %v574, 5
      %v577 = vshrl.u32 %v562, 16
      %v579 = vrot.slane %v577, 4
      %v580 = vor.u32 %v579, %v576
      %v581 = vrot.slane %v580, 4
      %v583 = vshll.u32 %v563, 16
      %v585 = vrot.slane %v583, 5
      %v586 = vsel %vm572, %v581, %v585
      %v587 = vshrl.u32 %v563, 16
      %v589 = vrot.slane %v587, 4
      %v590 = vor.u32 %v589, %v585
      %v591 = vrot.slane %v590, 4
      %v593 = vshll.u32 %v564, 16
      %v595 = vrot.slane %v593, 5
      %v596 = vsel %vm572, %v591, %v595
      %v597 = vshrl.u32 %v564, 16
      %v599 = vrot.slane %v597, 4
      %v600 = vor.u32 %v599, %v595
      %v601 = vrot.slane %v600, 4
      %v603 = vshll.u32 %v565, 16
      %v605 = vrot.slane %v603, 5
      %v606 = vsel %vm572, %v601, %v605
      %v607 = vshrl.u32 %v565, 16
      %v609 = vrot.slane %v607, 4
      %v610 = vor.u32 %v609, %v605
      %v611 = vrot.slane %v610, 4
      %v613 = vshll.u32 %v566, 16
      %v615 = vrot.slane %v613, 5
      %v616 = vsel %vm572, %v611, %v615
      %v617 = vshrl.u32 %v566, 16
      %v619 = vrot.slane %v617, 4
      %v620 = vor.u32 %v619, %v615
      %v621 = vrot.slane %v620, 4
      %v623 = vshll.u32 %v567, 16
      %v625 = vrot.slane %v623, 5
      %v626 = vsel %vm572, %v621, %v625
      %v627 = vshrl.u32 %v567, 16
      %v629 = vrot.slane %v627, 4
      %v630 = vor.u32 %v629, %v625
      %v631 = vrot.slane %v630, 4
      %v633 = vshll.u32 %v568, 16
      %v635 = vrot.slane %v633, 5
      %v636 = vsel %vm572, %v631, %v635
      %v637 = vshrl.u32 %v568, 16
      %v639 = vrot.slane %v637, 4
      %v640 = vor.u32 %v639, %v635
      %v641 = vrot.slane %v640, 4
      %v643 = vshll.u32 %v569, 16
      %v645 = vrot.slane %v643, 5
      %v646 = vsel %vm572, %v641, %v645
      %v647 = vshrl.u32 %v569, 16
      %v649 = vrot.slane %v647, 4
      %v650 = vor.u32 %v649, %v645
      %v651 = vrot.slane %v650, 4
      %vm652 = vcmp.ne.s16.totalorder %v576, 0
      %vm653 = vcmp.ne.s16.totalorder %v586, 0
      %vm654 = vcmp.ne.s16.totalorder %v596, 0
      %vm655 = vcmp.ne.s16.totalorder %v606, 0
      %vm656 = vcmp.ne.s16.totalorder %v616, 0
      %vm657 = vcmp.ne.s16.totalorder %v626, 0
      %vm658 = vcmp.ne.s16.totalorder %v636, 0
      %vm659 = vcmp.ne.s16.totalorder %v646, 0
      %vm660 = vcmp.ne.s16.totalorder %v651, 0
      %v661 = vsel %vm652, %v529, 0
      %v662 = vsel %vm653, %v530, 0
      %v663 = vsel %vm654, %v531, 0
      %v664 = vsel %vm655, %v532, 0
      %v665 = vsel %vm656, %v533, 0
      %v666 = vsel %vm657, %v534, 0
      %v667 = vsel %vm658, %v535, 0
      %v668 = vsel %vm659, %v536, 0
      %v669 = vsel %vm660, %v537, 0
      %v670 = vld [vmem:[%s1] sm:$0xf]
      %v671 = vld [vmem:[%s1 + $0x4] sm:$0x3]
      %s672 = scalar_lea.vmem %s1, 8
      %v673 = vld [vmem:[%s672] sm:$0xf]
      %v674 = vld [vmem:[%s672 + $0x4] sm:$0x3]
      %v683 = vunpack.c.l.b16 %v530
      %v684 = vunpack.c.l.b16 %v531
      %v685 = vunpack.c.l.b16 %v532
      %v686 = vunpack.c.l.b16 %v533
      %v687 = vunpack.c.l.b16 %v534
      %v688 = vunpack.c.l.b16 %v535
      %v689 = vunpack.c.l.b16 %v536
      %v690 = vunpack.c.l.b16 %v537
      %v691 = vpack.c.b16 %v684, %v683
      %v692 = vpack.c.b16 %v686, %v685
      %v693 = vpack.c.b16 %v688, %v687
      %v694 = vpack.c.b16 %v690, %v689
      %v697 = vunpack.c.l.b16 %v673
      %v698 = vunpack.c.l.b16 %v674
      %v699 = vpack.c.b16 %v698, %v697
      %vm700 = vcmask 97280
      %v702 = vsel %vm700, %v691, 0
      %v705 = vsel %vm700, %v692, 0
      %v708 = vsel %vm700, %v693, 0
      %v711 = vsel %vm700, %v694, 0
      %vm713 = vcmask 1045504
      %v715 = vsel %vm713, %v699, 0
      %717 = vmatprep.subr.bf16.mxu0 0
      %718 = vmatpush1.bf16.msra.mxu0 0
      %719 = vmatprep.subr.bf16.mxu0 0
      %720 = vmatpush1.bf16.msra.mxu0 0
      %721 = vmatprep.subr.bf16.mxu0 0
      %722 = vmatpush1.bf16.msra.mxu0 0
      %723 = vmatprep.subr.bf16.mxu0 0
      %724 = vmatpush1.bf16.msra.mxu0 0
      %725 = vmatprep.subr.bf16.mxu0 0
      %726 = vmatpush1.bf16.msra.mxu0 0
      %727 = vmatprep.subr.bf16.mxu0 0
      %728 = vmatpush1.bf16.msra.mxu0 0
      %729 = vmatprep.subr.bf16.mxu0 0
      %730 = vmatpush1.bf16.msra.mxu0 0
      %731 = vmatprep.subr.bf16.mxu0 0
      %732 = vmatpush1.bf16.msra.mxu0 %v715
      %733 = vmatprep.subr.bf16.mxu0 0
      %734 = vmatpush2.bf16.msra.mxu0 0
      %735 = vmatprep.subr.bf16.mxu0 0
      %736 = vmatpush2.bf16.msra.mxu0 0
      %737 = vmatprep.subr.bf16.mxu0 0
      %738 = vmatpush2.bf16.msra.mxu0 0
      %739 = vmatprep.subr.bf16.mxu0 0
      %740 = vmatpush2.bf16.msra.mxu0 0
      %741 = vmatprep.subr.bf16.mxu0 0
      %742 = vmatpush2.bf16.msra.mxu0 0
      %743 = vmatprep.subr.bf16.mxu0 0
      %744 = vmatpush2.bf16.msra.mxu0 0
      %745 = vmatprep.subr.bf16.mxu0 0
      %746 = vmatpush2.bf16.msra.mxu0 0
      %747 = vmatprep.subr.bf16.mxu0 0
      %748 = vmatpush2.bf16.msra.mxu0 0
      %749 = vmatprep.mubr.bf16.mxu0 0
      %750 = vmatmul.mubr.bf16.gmra.mxu0 %v702
      %v751 = vpop.f32.mrf.mxu0
      %v752 = vadd.f32 0.0, %v751
      %v753 = vpop.f32.mrf.mxu0
      %v754 = vpop.f32.mrf.mxu0
      %v755 = vadd.f32 0.0, %v754
      %v756 = vpop.f32.mrf.mxu0
      %757 = vmatprep.mubr.bf16.mxu0 0
      %758 = vmatmul.mubr.bf16.gmra.mxu0 %v705
      %v759 = vpop.f32.mrf.mxu0
      %v760 = vadd.f32 0.0, %v759
      %v761 = vpop.f32.mrf.mxu0
      %v762 = vpop.f32.mrf.mxu0
      %v763 = vadd.f32 0.0, %v762
      %v764 = vpop.f32.mrf.mxu0
      %765 = vmatprep.mubr.bf16.mxu0 0
      %766 = vmatmul.mubr.bf16.gmra.mxu0 %v708
      %v767 = vpop.f32.mrf.mxu0
      %v768 = vadd.f32 0.0, %v767
      %v769 = vpop.f32.mrf.mxu0
      %v770 = vpop.f32.mrf.mxu0
      %v771 = vadd.f32 0.0, %v770
      %v772 = vpop.f32.mrf.mxu0
      %773 = vmatprep.mubr.bf16.mxu0 0
      %774 = vmatmul.mubr.bf16.gmra.mxu0 %v711
      %v775 = vpop.f32.mrf.mxu0
      %v776 = vadd.f32 0.0, %v775
      %v777 = vpop.f32.mrf.mxu0
      %v778 = vpop.f32.mrf.mxu0
      %v779 = vadd.f32 0.0, %v778
      %v780 = vpop.f32.mrf.mxu0
      %781 = vdwg.mxu0
      %v791 = vunpack.c.l.b16 %v661
      %v792 = vunpack.c.l.b16 %v662
      %v793 = vunpack.c.l.b16 %v663
      %v794 = vunpack.c.l.b16 %v664
      %v795 = vunpack.c.l.b16 %v665
      %v796 = vunpack.c.l.b16 %v666
      %v797 = vunpack.c.l.b16 %v667
      %v798 = vunpack.c.l.b16 %v668
      %v799 = vunpack.c.l.b16 %v669
      %v800 = vpack.c.b16 %v792, %v791
      %v801 = vpack.c.b16 %v794, %v793
      %v802 = vpack.c.b16 %v796, %v795
      %v803 = vpack.c.b16 %v798, %v797
      %v804 = vpack.c.b16 %v799, %v799
      %vm805 = vsmask.f32 4352
      %v807 = vshrl.u32 %v800, 16
      %v809 = vrot.slane %v807, 3
      %v810 = vshll.u32 %v800, 16
      %v812 = vrot.slane %v810, 4
      %v813 = vor.u32 %v809, %v812
      %v815 = vshrl.u32 %v801, 16
      %v817 = vrot.slane %v815, 3
      %v818 = vshll.u32 %v801, 16
      %v820 = vrot.slane %v818, 4
      %v821 = vor.u32 %v817, %v820
      %v822 = vsel %vm805, %v813, %v821
      %v824 = vshrl.u32 %v802, 16
      %v826 = vrot.slane %v824, 3
      %v827 = vshll.u32 %v802, 16
      %v829 = vrot.slane %v827, 4
      %v830 = vor.u32 %v826, %v829
      %v831 = vsel %vm805, %v821, %v830
      %v833 = vshrl.u32 %v803, 16
      %v835 = vrot.slane %v833, 3
      %v836 = vshll.u32 %v803, 16
      %v838 = vrot.slane %v836, 4
      %v839 = vor.u32 %v835, %v838
      %v840 = vsel %vm805, %v830, %v839
      %v842 = vshrl.u32 %v804, 16
      %v844 = vrot.slane %v842, 3
      %v845 = vshll.u32 %v804, 16
      %v847 = vrot.slane %v845, 4
      %v848 = vor.u32 %v844, %v847
      %v849 = vsel %vm805, %v839, %v848
      %v852 = vunpack.c.l.b16 %v670
      %v853 = vunpack.c.l.b16 %v671
      %v854 = vpack.c.b16 %v853, %v852
      %v856 = vsel %vm700, %v822, 0
      %v859 = vsel %vm700, %v831, 0
      %v862 = vsel %vm700, %v840, 0
      %v865 = vsel %vm700, %v849, 0
      %v868 = vsel %vm713, %v854, 0
      %870 = vmatprep.subr.bf16.mxu0 0
      %871 = vmatpush1.bf16.msra.mxu0 0
      %872 = vmatprep.subr.bf16.mxu0 0
      %873 = vmatpush1.bf16.msra.mxu0 0
      %874 = vmatprep.subr.bf16.mxu0 0
      %875 = vmatpush1.bf16.msra.mxu0 0
      %876 = vmatprep.subr.bf16.mxu0 0
      %877 = vmatpush1.bf16.msra.mxu0 0
      %878 = vmatprep.subr.bf16.mxu0 0
      %879 = vmatpush1.bf16.msra.mxu0 0
      %880 = vmatprep.subr.bf16.mxu0 0
      %881 = vmatpush1.bf16.msra.mxu0 0
      %882 = vmatprep.subr.bf16.mxu0 0
      %883 = vmatpush1.bf16.msra.mxu0 0
      %884 = vmatprep.subr.bf16.mxu0 0
      %885 = vmatpush1.bf16.msra.mxu0 %v868
      %886 = vmatprep.subr.bf16.mxu0 0
      %887 = vmatpush2.bf16.msra.mxu0 0
      %888 = vmatprep.subr.bf16.mxu0 0
      %889 = vmatpush2.bf16.msra.mxu0 0
      %890 = vmatprep.subr.bf16.mxu0 0
      %891 = vmatpush2.bf16.msra.mxu0 0
      %892 = vmatprep.subr.bf16.mxu0 0
      %893 = vmatpush2.bf16.msra.mxu0 0
      %894 = vmatprep.subr.bf16.mxu0 0
      %895 = vmatpush2.bf16.msra.mxu0 0
      %896 = vmatprep.subr.bf16.mxu0 0
      %897 = vmatpush2.bf16.msra.mxu0 0
      %898 = vmatprep.subr.bf16.mxu0 0
      %899 = vmatpush2.bf16.msra.mxu0 0
      %900 = vmatprep.subr.bf16.mxu0 0
      %901 = vmatpush2.bf16.msra.mxu0 0
      %902 = vmatprep.mubr.bf16.mxu0 0
      %903 = vmatmul.mubr.bf16.gmra.mxu0 %v856
      %v904 = vpop.f32.mrf.mxu0
      %v905 = vadd.f32 %v752, %v904
      %v906 = vpop.f32.mrf.mxu0
      %v907 = vpop.f32.mrf.mxu0
      %v908 = vadd.f32 %v755, %v907
      %v909 = vpop.f32.mrf.mxu0
      %910 = vmatprep.mubr.bf16.mxu0 0
      %911 = vmatmul.mubr.bf16.gmra.mxu0 %v859
      %v912 = vpop.f32.mrf.mxu0
      %v913 = vadd.f32 %v760, %v912
      %v914 = vpop.f32.mrf.mxu0
      %v915 = vpop.f32.mrf.mxu0
      %v916 = vadd.f32 %v763, %v915
      %v917 = vpop.f32.mrf.mxu0
      %918 = vmatprep.mubr.bf16.mxu0 0
      %919 = vmatmul.mubr.bf16.gmra.mxu0 %v862
      %v920 = vpop.f32.mrf.mxu0
      %v921 = vadd.f32 %v768, %v920
      %v922 = vpop.f32.mrf.mxu0
      %v923 = vpop.f32.mrf.mxu0
      %v924 = vadd.f32 %v771, %v923
      %v925 = vpop.f32.mrf.mxu0
      %926 = vmatprep.mubr.bf16.mxu0 0
      %927 = vmatmul.mubr.bf16.gmra.mxu0 %v865
      %v928 = vpop.f32.mrf.mxu0
      %v929 = vadd.f32 %v776, %v928
      %v930 = vpop.f32.mrf.mxu0
      %v931 = vpop.f32.mrf.mxu0
      %v932 = vadd.f32 %v779, %v931
      %v933 = vpop.f32.mrf.mxu0
      %934 = vdwg.mxu0
      %v935 = vld [vmem:[#allocation2 + $0x4] sm:$0xf]
      %v936 = vld [vmem:[#allocation2 + $0x8] sm:$0xf]
      %v937 = vld [vmem:[#allocation2 + $0xc] sm:$0xf]
      %v938 = vld [vmem:[#allocation2 + $0x10] sm:$0xf]
      %v939 = vld [vmem:[#allocation2 + $0x14] sm:$0xf]
      %v940 = vld [vmem:[#allocation2 + $0x18] sm:$0xf]
      %v941 = vld [vmem:[#allocation2 + $0x1c] sm:$0xf]
      %v942 = vld [vmem:[#allocation2 + $0x20] sm:$0xf]
      %v943 = vld [vmem:[#allocation2 + $0x24] sm:$0x1]
      %v944 = vsel %vm403, 1, 0
      %v945 = vsel %vm404, 1, 0
      %v946 = vsel %vm405, 1, 0
      %v947 = vsel %vm406, 1, 0
      %v948 = vsel %vm407, 1, 0
      %v949 = vsel %vm408, 1, 0
      %v950 = vsel %vm409, 1, 0
      %v951 = vsel %vm410, 1, 0
      %vm952 = vcmp.eq.s32.totalorder %v944, 1
      %vm953 = vcmp.eq.s32.totalorder %v945, 1
      %vm954 = vcmp.eq.s32.totalorder %v946, 1
      %vm955 = vcmp.eq.s32.totalorder %v947, 1
      %vm956 = vcmp.eq.s32.totalorder %v948, 1
      %vm957 = vcmp.eq.s32.totalorder %v949, 1
      %vm958 = vcmp.eq.s32.totalorder %v950, 1
      %vm959 = vcmp.eq.s32.totalorder %v951, 1
      %vm960 = vmpackc.low %vm952, %vm952
      %vm961 = vmpackc.low %vm953, %vm953
      %vm962 = vmpackc.low %vm954, %vm954
      %vm963 = vmpackc.low %vm955, %vm955
      %vm964 = vmpackc.low %vm956, %vm956
      %vm965 = vmpackc.low %vm957, %vm957
      %vm966 = vmpackc.low %vm958, %vm958
      %vm967 = vmpackc.low %vm959, %vm959
      %v968 = vsel %vm960, 65537, 0
      %v969 = vsel %vm961, 65537, 0
      %v970 = vsel %vm962, 65537, 0
      %v971 = vsel %vm963, 65537, 0
      %v972 = vsel %vm964, 65537, 0
      %v973 = vsel %vm965, 65537, 0
      %v974 = vsel %vm966, 65537, 0
      %v975 = vsel %vm967, 65537, 0
      %vm976 = vsmask.f32 256
      %vm977 = vsmask.f32 4368
      %vm978 = vmor %vm976, %vm977
      %v980 = vshrl.u32 %v968, 16
      %v982 = vrot.slane %v980, 7
      %v983 = vshll.u32 %v968, 16
      %v985 = vor.u32 %v982, %v983
      %v986 = vrot.slane %v982, 4
      %v988 = vshrl.u32 %v969, 16
      %v990 = vrot.slane %v988, 7
      %v991 = vshll.u32 %v969, 16
      %v993 = vor.u32 %v990, %v991
      %v994 = vsel %vm978, %v986, %v993
      %v995 = vrot.slane %v990, 4
      %v997 = vshrl.u32 %v970, 16
      %v999 = vrot.slane %v997, 7
      %v1000 = vshll.u32 %v970, 16
      %v1002 = vor.u32 %v999, %v1000
      %v1003 = vsel %vm978, %v995, %v1002
      %v1004 = vrot.slane %v999, 4
      %v1006 = vshrl.u32 %v971, 16
      %v1008 = vrot.slane %v1006, 7
      %v1009 = vshll.u32 %v971, 16
      %v1011 = vor.u32 %v1008, %v1009
      %v1012 = vsel %vm978, %v1004, %v1011
      %v1013 = vrot.slane %v1008, 4
      %v1015 = vshrl.u32 %v972, 16
      %v1017 = vrot.slane %v1015, 7
      %v1018 = vshll.u32 %v972, 16
      %v1020 = vor.u32 %v1017, %v1018
      %v1021 = vsel %vm978, %v1013, %v1020
      %v1022 = vrot.slane %v1017, 4
      %v1024 = vshrl.u32 %v973, 16
      %v1026 = vrot.slane %v1024, 7
      %v1027 = vshll.u32 %v973, 16
      %v1029 = vor.u32 %v1026, %v1027
      %v1030 = vsel %vm978, %v1022, %v1029
      %v1031 = vrot.slane %v1026, 4
      %v1033 = vshrl.u32 %v974, 16
      %v1035 = vrot.slane %v1033, 7
      %v1036 = vshll.u32 %v974, 16
      %v1038 = vor.u32 %v1035, %v1036
      %v1039 = vsel %vm978, %v1031, %v1038
      %v1040 = vrot.slane %v1035, 4
      %v1042 = vshrl.u32 %v975, 16
      %v1044 = vrot.slane %v1042, 7
      %v1045 = vshll.u32 %v975, 16
      %v1047 = vor.u32 %v1044, %v1045
      %v1048 = vsel %vm978, %v1040, %v1047
      %v1049 = vrot.slane %v1044, 4
      %vm1050 = vcmp.ne.s16.totalorder %v985, 0
      %vm1051 = vcmp.ne.s16.totalorder %v994, 0
      %vm1052 = vcmp.ne.s16.totalorder %v1003, 0
      %vm1053 = vcmp.ne.s16.totalorder %v1012, 0
      %vm1054 = vcmp.ne.s16.totalorder %v1021, 0
      %vm1055 = vcmp.ne.s16.totalorder %v1030, 0
      %vm1056 = vcmp.ne.s16.totalorder %v1039, 0
      %vm1057 = vcmp.ne.s16.totalorder %v1048, 0
      %vm1058 = vcmp.ne.s16.totalorder %v1049, 0
      %v1059 = vsel %vm1050, %v935, 0
      %v1060 = vsel %vm1051, %v936, 0
      %v1061 = vsel %vm1052, %v937, 0
      %v1062 = vsel %vm1053, %v938, 0
      %v1063 = vsel %vm1054, %v939, 0
      %v1064 = vsel %vm1055, %v940, 0
      %v1065 = vsel %vm1056, %v941, 0
      %v1066 = vsel %vm1057, %v942, 0
      %v1067 = vsel %vm1058, %v943, 0
      %s1068 = scalar_lea.vmem %s1, 16
      %v1069 = vld [vmem:[%s1068] sm:$0xf]
      %v1070 = vld [vmem:[%s1068 + $0x4] sm:$0x3]
      %v1080 = vunpack.c.l.b16 %v1059
      %v1081 = vunpack.c.l.b16 %v1060
      %v1082 = vunpack.c.l.b16 %v1061
      %v1083 = vunpack.c.l.b16 %v1062
      %v1084 = vunpack.c.l.b16 %v1063
      %v1085 = vunpack.c.l.b16 %v1064
      %v1086 = vunpack.c.l.b16 %v1065
      %v1087 = vunpack.c.l.b16 %v1066
      %v1088 = vunpack.c.l.b16 %v1067
      %v1089 = vpack.c.b16 %v1081, %v1080
      %v1090 = vpack.c.b16 %v1083, %v1082
      %v1091 = vpack.c.b16 %v1085, %v1084
      %v1092 = vpack.c.b16 %v1087, %v1086
      %v1093 = vpack.c.b16 %v1088, %v1088
      %vm1094 = vsmask.f32 7424
      %v1096 = vshrl.u32 %v1089, 16
      %v1098 = vshll.u32 %v1089, 16
      %v1100 = vrot.slane %v1098, 1
      %v1101 = vor.u32 %v1096, %v1100
      %v1103 = vshll.u32 %v1090, 16
      %v1105 = vrot.slane %v1103, 1
      %v1106 = vsel %vm1094, %v1101, %v1105
      %v1107 = vshrl.u32 %v1090, 16
      %v1109 = vor.u32 %v1107, %v1105
      %v1111 = vshll.u32 %v1091, 16
      %v1113 = vrot.slane %v1111, 1
      %v1114 = vsel %vm1094, %v1109, %v1113
      %v1115 = vshrl.u32 %v1091, 16
      %v1117 = vor.u32 %v1115, %v1113
      %v1119 = vshll.u32 %v1092, 16
      %v1121 = vrot.slane %v1119, 1
      %v1122 = vsel %vm1094, %v1117, %v1121
      %v1123 = vshrl.u32 %v1092, 16
      %v1125 = vor.u32 %v1123, %v1121
      %v1127 = vshll.u32 %v1093, 16
      %v1129 = vrot.slane %v1127, 1
      %v1130 = vsel %vm1094, %v1125, %v1129
      %v1133 = vunpack.c.l.b16 %v1069
      %v1134 = vunpack.c.l.b16 %v1070
      %v1135 = vpack.c.b16 %v1134, %v1133
      %v1137 = vsel %vm700, %v1106, 0
      %v1140 = vsel %vm700, %v1114, 0
      %v1143 = vsel %vm700, %v1122, 0
      %v1146 = vsel %vm700, %v1130, 0
      %v1149 = vsel %vm713, %v1135, 0
      %1151 = vmatprep.subr.bf16.mxu0 0
      %1152 = vmatpush1.bf16.msra.mxu0 0
      %1153 = vmatprep.subr.bf16.mxu0 0
      %1154 = vmatpush1.bf16.msra.mxu0 0
      %1155 = vmatprep.subr.bf16.mxu0 0
      %1156 = vmatpush1.bf16.msra.mxu0 0
      %1157 = vmatprep.subr.bf16.mxu0 0
      %1158 = vmatpush1.bf16.msra.mxu0 0
      %1159 = vmatprep.subr.bf16.mxu0 0
      %1160 = vmatpush1.bf16.msra.mxu0 0
      %1161 = vmatprep.subr.bf16.mxu0 0
      %1162 = vmatpush1.bf16.msra.mxu0 0
      %1163 = vmatprep.subr.bf16.mxu0 0
      %1164 = vmatpush1.bf16.msra.mxu0 0
      %1165 = vmatprep.subr.bf16.mxu0 0
      %1166 = vmatpush1.bf16.msra.mxu0 %v1149
      %1167 = vmatprep.subr.bf16.mxu0 0
      %1168 = vmatpush2.bf16.msra.mxu0 0
      %1169 = vmatprep.subr.bf16.mxu0 0
      %1170 = vmatpush2.bf16.msra.mxu0 0
      %1171 = vmatprep.subr.bf16.mxu0 0
      %1172 = vmatpush2.bf16.msra.mxu0 0
      %1173 = vmatprep.subr.bf16.mxu0 0
      %1174 = vmatpush2.bf16.msra.mxu0 0
      %1175 = vmatprep.subr.bf16.mxu0 0
      %1176 = vmatpush2.bf16.msra.mxu0 0
      %1177 = vmatprep.subr.bf16.mxu0 0
      %1178 = vmatpush2.bf16.msra.mxu0 0
      %1179 = vmatprep.subr.bf16.mxu0 0
      %1180 = vmatpush2.bf16.msra.mxu0 0
      %1181 = vmatprep.subr.bf16.mxu0 0
      %1182 = vmatpush2.bf16.msra.mxu0 0
      %1183 = vmatprep.mubr.bf16.mxu0 0
      %1184 = vmatmul.mubr.bf16.gmra.mxu0 %v1137
      %v1185 = vpop.f32.mrf.mxu0
      %v1186 = vadd.f32 0.0, %v1185
      %v1187 = vpop.f32.mrf.mxu0
      %v1188 = vpop.f32.mrf.mxu0
      %v1189 = vadd.f32 0.0, %v1188
      %v1190 = vpop.f32.mrf.mxu0
      %1191 = vmatprep.mubr.bf16.mxu0 0
      %1192 = vmatmul.mubr.bf16.gmra.mxu0 %v1140
      %v1193 = vpop.f32.mrf.mxu0
      %v1194 = vadd.f32 0.0, %v1193
      %v1195 = vpop.f32.mrf.mxu0
      %v1196 = vpop.f32.mrf.mxu0
      %v1197 = vadd.f32 0.0, %v1196
      %v1198 = vpop.f32.mrf.mxu0
      %1199 = vmatprep.mubr.bf16.mxu0 0
      %1200 = vmatmul.mubr.bf16.gmra.mxu0 %v1143
      %v1201 = vpop.f32.mrf.mxu0
      %v1202 = vadd.f32 0.0, %v1201
      %v1203 = vpop.f32.mrf.mxu0
      %v1204 = vpop.f32.mrf.mxu0
      %v1205 = vadd.f32 0.0, %v1204
      %v1206 = vpop.f32.mrf.mxu0
      %1207 = vmatprep.mubr.bf16.mxu0 0
      %1208 = vmatmul.mubr.bf16.gmra.mxu0 %v1146
      %v1209 = vpop.f32.mrf.mxu0
      %v1210 = vadd.f32 0.0, %v1209
      %v1211 = vpop.f32.mrf.mxu0
      %v1212 = vpop.f32.mrf.mxu0
      %v1213 = vadd.f32 0.0, %v1212
      %v1214 = vpop.f32.mrf.mxu0
      %1215 = vdwg.mxu0
      %v1216 = vadd.f32 %v905, %v1186
      %v1217 = vadd.f32 %v908, %v1189
      %v1218 = vadd.f32 %v913, %v1194
      %v1219 = vadd.f32 %v916, %v1197
      %v1220 = vadd.f32 %v921, %v1202
      %v1221 = vadd.f32 %v924, %v1205
      %v1222 = vadd.f32 %v929, %v1210
      %v1223 = vadd.f32 %v932, %v1213
      %v1224 = vld [vmem:[%s2] sm:$0x1]
      %v1226 = vlaneseq
      %v1227 = vshrl.u32 %v1226, 7
      %v1228 = vsub.s32 0, %v1227
      %v1229 = vrot.slane %v1224, %v1228
      %v1231 = vadd.f32 %v1216, %v1229
      %v1232 = vadd.f32 %v1217, %v1229
      %v1233 = vadd.f32 %v1218, %v1229
      %v1234 = vadd.f32 %v1219, %v1229
      %v1235 = vadd.f32 %v1220, %v1229
      %v1236 = vadd.f32 %v1221, %v1229
      %v1237 = vadd.f32 %v1222, %v1229
      %v1238 = vadd.f32 %v1223, %v1229
      %v1239 = vmax.f32 %v1231, 0.0
      %v1240 = vmax.f32 %v1232, 0.0
      %v1241 = vmax.f32 %v1233, 0.0
      %v1242 = vmax.f32 %v1234, 0.0
      %v1243 = vmax.f32 %v1235, 0.0
      %v1244 = vmax.f32 %v1236, 0.0
      %v1245 = vmax.f32 %v1237, 0.0
      %v1246 = vmax.f32 %v1238, 0.0
      %v1247 = vpack.c.bf16 %v1239, %v1239
      %v1248 = vpack.c.bf16 %v1240, %v1240
      %v1249 = vpack.c.bf16 %v1241, %v1241
      %v1250 = vpack.c.bf16 %v1242, %v1242
      %v1251 = vpack.c.bf16 %v1243, %v1243
      %v1252 = vpack.c.bf16 %v1244, %v1244
      %v1253 = vpack.c.bf16 %v1245, %v1245
      %v1254 = vpack.c.bf16 %v1246, %v1246
      %1263 = vrot.lane.b32.xlu0 %v1247, 8
      %v1264 = vpop.permute.xlu0 %1263
      %1265 = vrot.lane.b32.xlu0 %v1248, 8
      %v1266 = vpop.permute.xlu0 %1265
      %1267 = vrot.lane.b32.xlu0 %v1249, 8
      %v1268 = vpop.permute.xlu0 %1267
      %1269 = vrot.lane.b32.xlu0 %v1250, 8
      %v1270 = vpop.permute.xlu0 %1269
      %1271 = vrot.lane.b32.xlu0 %v1251, 8
      %v1272 = vpop.permute.xlu0 %1271
      %1273 = vrot.lane.b32.xlu0 %v1252, 8
      %v1274 = vpop.permute.xlu0 %1273
      %1275 = vrot.lane.b32.xlu0 %v1253, 8
      %v1276 = vpop.permute.xlu0 %1275
      %1277 = vrot.lane.b32.xlu0 %v1254, 8
      %v1278 = vpop.permute.xlu0 %1277
      %1279 = vrot.lane.b32.xlu0 %v1248, 16
      %v1280 = vpop.permute.xlu0 %1279
      %1281 = vrot.lane.b32.xlu0 %v1249, 16
      %v1282 = vpop.permute.xlu0 %1281
      %1283 = vrot.lane.b32.xlu0 %v1250, 16
      %v1284 = vpop.permute.xlu0 %1283
      %1285 = vrot.lane.b32.xlu0 %v1251, 16
      %v1286 = vpop.permute.xlu0 %1285
      %1287 = vrot.lane.b32.xlu0 %v1252, 16
      %v1288 = vpop.permute.xlu0 %1287
      %1289 = vrot.lane.b32.xlu0 %v1253, 16
      %v1290 = vpop.permute.xlu0 %1289
      %1291 = vrot.lane.b32.xlu0 %v1254, 16
      %v1292 = vpop.permute.xlu0 %1291
      %1293 = vrot.lane.b32.xlu0 0, 16
      %v1294 = vpop.permute.xlu0 %1293
      %v1296 = vsel %vm495, 0, %v1264
      %v1299 = vsel %vm495, %v1247, %v1266
      %v1302 = vsel %vm495, %v1248, %v1268
      %v1305 = vsel %vm495, %v1249, %v1270
      %v1308 = vsel %vm495, %v1250, %v1272
      %v1311 = vsel %vm495, %v1251, %v1274
      %v1314 = vsel %vm495, %v1252, %v1276
      %v1317 = vsel %vm495, %v1253, %v1278
      %vm1318 = vcmask 130048
      %v1320 = vsel %vm1318, %v1296, %v1280
      %v1323 = vsel %vm1318, %v1299, %v1282
      %v1326 = vsel %vm1318, %v1302, %v1284
      %v1329 = vsel %vm1318, %v1305, %v1286
      %v1332 = vsel %vm1318, %v1308, %v1288
      %v1335 = vsel %vm1318, %v1311, %v1290
      %v1338 = vsel %vm1318, %v1314, %v1292
      %v1341 = vsel %vm1318, %v1317, %v1294
      %vm1343 = vcmask 191488
      %1344 = vst.msk [vmem:[#allocation3 + $0x4] sm:$0xf] %vm1343, %v1320
      %1345 = vst.msk [vmem:[#allocation3 + $0x8] sm:$0xf] %vm1343, %v1323
      %1346 = vst.msk [vmem:[#allocation3 + $0xc] sm:$0xf] %vm1343, %v1326
      %1347 = vst.msk [vmem:[#allocation3 + $0x10] sm:$0xf] %vm1343, %v1329
      %1348 = vst.msk [vmem:[#allocation3 + $0x14] sm:$0xf] %vm1343, %v1332
      %1349 = vst.msk [vmem:[#allocation3 + $0x18] sm:$0xf] %vm1343, %v1335
      %1350 = vst.msk [vmem:[#allocation3 + $0x1c] sm:$0xf] %vm1343, %v1338
      %1351 = vst.msk [vmem:[#allocation3 + $0x20] sm:$0xf] %vm1343, %v1341
      %v1352 = vld [vmem:[#allocation3] sm:$0x8]
      %v1353 = vld [vmem:[#allocation3 + $0x4] sm:$0xf]
      %v1354 = vld [vmem:[#allocation3 + $0x8] sm:$0xf]
      %v1355 = vld [vmem:[#allocation3 + $0xc] sm:$0xf]
      %v1356 = vld [vmem:[#allocation3 + $0x10] sm:$0xf]
      %v1357 = vld [vmem:[#allocation3 + $0x14] sm:$0xf]
      %v1358 = vld [vmem:[#allocation3 + $0x18] sm:$0xf]
      %v1359 = vld [vmem:[#allocation3 + $0x1c] sm:$0xf]
      %v1360 = vld [vmem:[#allocation3 + $0x20] sm:$0xf]
      %v1361 = vsel %vm652, %v1352, 0
      %v1362 = vsel %vm653, %v1353, 0
      %v1363 = vsel %vm654, %v1354, 0
      %v1364 = vsel %vm655, %v1355, 0
      %v1365 = vsel %vm656, %v1356, 0
      %v1366 = vsel %vm657, %v1357, 0
      %v1367 = vsel %vm658, %v1358, 0
      %v1368 = vsel %vm659, %v1359, 0
      %v1369 = vsel %vm660, %v1360, 0
      %v1370 = vld [vmem:[%s3] sm:$0xf]
      %v1371 = vld [vmem:[%s3 + $0x4] sm:$0xf]
      %v1372 = vld [vmem:[%s3 + $0x8] sm:$0xf]
      %s1373 = scalar_lea.vmem %s3, 12
      %v1374 = vld [vmem:[%s1373] sm:$0xf]
      %v1375 = vld [vmem:[%s1373 + $0x4] sm:$0xf]
      %v1376 = vld [vmem:[%s1373 + $0x8] sm:$0xf]
      %v1385 = vunpack.c.l.b16 %v1353
      %v1386 = vunpack.c.l.b16 %v1354
      %v1387 = vunpack.c.l.b16 %v1355
      %v1388 = vunpack.c.l.b16 %v1356
      %v1389 = vunpack.c.l.b16 %v1357
      %v1390 = vunpack.c.l.b16 %v1358
      %v1391 = vunpack.c.l.b16 %v1359
      %v1392 = vunpack.c.l.b16 %v1360
      %v1393 = vpack.c.b16 %v1386, %v1385
      %v1394 = vpack.c.b16 %v1388, %v1387
      %v1395 = vpack.c.b16 %v1390, %v1389
      %v1396 = vpack.c.b16 %v1392, %v1391
      %v1400 = vunpack.c.l.b16 %v1374
      %v1401 = vunpack.c.l.b16 %v1375
      %v1402 = vunpack.c.l.b16 %v1376
      %v1403 = vpack.c.b16 %v1401, %v1400
      %v1404 = vpack.c.b16 %v1402, %v1402
      %vm1406 = vcmask 195584
      %v1408 = vsel %vm1406, %v1393, 0
      %v1411 = vsel %vm1406, %v1394, 0
      %v1414 = vsel %vm1406, %v1395, 0
      %v1417 = vsel %vm1406, %v1396, 0
      %vm1419 = vcmask 1043456
      %v1421 = vsel %vm1419, %v1404, 0
      %1423 = vmatprep.subr.bf16.mxu0 0
      %1424 = vmatpush1.bf16.msra.mxu0 0
      %1425 = vmatprep.subr.bf16.mxu0 0
      %1426 = vmatpush1.bf16.msra.mxu0 0
      %1427 = vmatprep.subr.bf16.mxu0 0
      %1428 = vmatpush1.bf16.msra.mxu0 0
      %1429 = vmatprep.subr.bf16.mxu0 0
      %1430 = vmatpush1.bf16.msra.mxu0 0
      %1431 = vmatprep.subr.bf16.mxu0 0
      %1432 = vmatpush1.bf16.msra.mxu0 0
      %1433 = vmatprep.subr.bf16.mxu0 0
      %1434 = vmatpush1.bf16.msra.mxu0 0
      %1435 = vmatprep.subr.bf16.mxu0 0
      %1436 = vmatpush1.bf16.msra.mxu0 %v1421
      %1437 = vmatprep.subr.bf16.mxu0 0
      %1438 = vmatpush1.bf16.msra.mxu0 %v1403
      %1439 = vmatprep.subr.bf16.mxu0 0
      %1440 = vmatpush2.bf16.msra.mxu0 0
      %1441 = vmatprep.subr.bf16.mxu0 0
      %1442 = vmatpush2.bf16.msra.mxu0 0
      %1443 = vmatprep.subr.bf16.mxu0 0
      %1444 = vmatpush2.bf16.msra.mxu0 0
      %1445 = vmatprep.subr.bf16.mxu0 0
      %1446 = vmatpush2.bf16.msra.mxu0 0
      %1447 = vmatprep.subr.bf16.mxu0 0
      %1448 = vmatpush2.bf16.msra.mxu0 0
      %1449 = vmatprep.subr.bf16.mxu0 0
      %1450 = vmatpush2.bf16.msra.mxu0 0
      %1451 = vmatprep.subr.bf16.mxu0 0
      %1452 = vmatpush2.bf16.msra.mxu0 0
      %1453 = vmatprep.subr.bf16.mxu0 0
      %1454 = vmatpush2.bf16.msra.mxu0 0
      %1455 = vmatprep.mubr.bf16.mxu0 0
      %1456 = vmatmul.mubr.bf16.gmra.mxu0 %v1408
      %v1457 = vpop.f32.mrf.mxu0
      %v1458 = vadd.f32 0.0, %v1457
      %v1459 = vpop.f32.mrf.mxu0
      %v1460 = vpop.f32.mrf.mxu0
      %v1461 = vadd.f32 0.0, %v1460
      %v1462 = vpop.f32.mrf.mxu0
      %1463 = vmatprep.mubr.bf16.mxu0 0
      %1464 = vmatmul.mubr.bf16.gmra.mxu0 %v1411
      %v1465 = vpop.f32.mrf.mxu0
      %v1466 = vadd.f32 0.0, %v1465
      %v1467 = vpop.f32.mrf.mxu0
      %v1468 = vpop.f32.mrf.mxu0
      %v1469 = vadd.f32 0.0, %v1468
      %v1470 = vpop.f32.mrf.mxu0
      %1471 = vmatprep.mubr.bf16.mxu0 0
      %1472 = vmatmul.mubr.bf16.gmra.mxu0 %v1414
      %v1473 = vpop.f32.mrf.mxu0
      %v1474 = vadd.f32 0.0, %v1473
      %v1475 = vpop.f32.mrf.mxu0
      %v1476 = vpop.f32.mrf.mxu0
      %v1477 = vadd.f32 0.0, %v1476
      %v1478 = vpop.f32.mrf.mxu0
      %1479 = vmatprep.mubr.bf16.mxu0 0
      %1480 = vmatmul.mubr.bf16.gmra.mxu0 %v1417
      %v1481 = vpop.f32.mrf.mxu0
      %v1482 = vadd.f32 0.0, %v1481
      %v1483 = vpop.f32.mrf.mxu0
      %v1484 = vpop.f32.mrf.mxu0
      %v1485 = vadd.f32 0.0, %v1484
      %v1486 = vpop.f32.mrf.mxu0
      %1487 = vdwg.mxu0
      %v1497 = vunpack.c.l.b16 %v1361
      %v1498 = vunpack.c.l.b16 %v1362
      %v1499 = vunpack.c.l.b16 %v1363
      %v1500 = vunpack.c.l.b16 %v1364
      %v1501 = vunpack.c.l.b16 %v1365
      %v1502 = vunpack.c.l.b16 %v1366
      %v1503 = vunpack.c.l.b16 %v1367
      %v1504 = vunpack.c.l.b16 %v1368
      %v1505 = vunpack.c.l.b16 %v1369
      %v1506 = vpack.c.b16 %v1498, %v1497
      %v1507 = vpack.c.b16 %v1500, %v1499
      %v1508 = vpack.c.b16 %v1502, %v1501
      %v1509 = vpack.c.b16 %v1504, %v1503
      %v1510 = vpack.c.b16 %v1505, %v1505
      %v1512 = vshrl.u32 %v1506, 16
      %v1514 = vrot.slane %v1512, 3
      %v1515 = vshll.u32 %v1506, 16
      %v1517 = vrot.slane %v1515, 4
      %v1518 = vor.u32 %v1514, %v1517
      %v1520 = vshrl.u32 %v1507, 16
      %v1522 = vrot.slane %v1520, 3
      %v1523 = vshll.u32 %v1507, 16
      %v1525 = vrot.slane %v1523, 4
      %v1526 = vor.u32 %v1522, %v1525
      %v1527 = vsel %vm805, %v1518, %v1526
      %v1529 = vshrl.u32 %v1508, 16
      %v1531 = vrot.slane %v1529, 3
      %v1532 = vshll.u32 %v1508, 16
      %v1534 = vrot.slane %v1532, 4
      %v1535 = vor.u32 %v1531, %v1534
      %v1536 = vsel %vm805, %v1526, %v1535
      %v1538 = vshrl.u32 %v1509, 16
      %v1540 = vrot.slane %v1538, 3
      %v1541 = vshll.u32 %v1509, 16
      %v1543 = vrot.slane %v1541, 4
      %v1544 = vor.u32 %v1540, %v1543
      %v1545 = vsel %vm805, %v1535, %v1544
      %v1547 = vshrl.u32 %v1510, 16
      %v1549 = vrot.slane %v1547, 3
      %v1550 = vshll.u32 %v1510, 16
      %v1552 = vrot.slane %v1550, 4
      %v1553 = vor.u32 %v1549, %v1552
      %v1554 = vsel %vm805, %v1544, %v1553
      %v1558 = vunpack.c.l.b16 %v1370
      %v1559 = vunpack.c.l.b16 %v1371
      %v1560 = vunpack.c.l.b16 %v1372
      %v1561 = vpack.c.b16 %v1559, %v1558
      %v1562 = vpack.c.b16 %v1560, %v1560
      %v1565 = vsel %vm1406, %v1527, 0
      %v1568 = vsel %vm1406, %v1536, 0
      %v1571 = vsel %vm1406, %v1545, 0
      %v1574 = vsel %vm1406, %v1554, 0
      %v1577 = vsel %vm1419, %v1562, 0
      %1579 = vmatprep.subr.bf16.mxu0 0
      %1580 = vmatpush1.bf16.msra.mxu0 0
      %1581 = vmatprep.subr.bf16.mxu0 0
      %1582 = vmatpush1.bf16.msra.mxu0 0
      %1583 = vmatprep.subr.bf16.mxu0 0
      %1584 = vmatpush1.bf16.msra.mxu0 0
      %1585 = vmatprep.subr.bf16.mxu0 0
      %1586 = vmatpush1.bf16.msra.mxu0 0
      %1587 = vmatprep.subr.bf16.mxu0 0
      %1588 = vmatpush1.bf16.msra.mxu0 0
      %1589 = vmatprep.subr.bf16.mxu0 0
      %1590 = vmatpush1.bf16.msra.mxu0 0
      %1591 = vmatprep.subr.bf16.mxu0 0
      %1592 = vmatpush1.bf16.msra.mxu0 %v1577
      %1593 = vmatprep.subr.bf16.mxu0 0
      %1594 = vmatpush1.bf16.msra.mxu0 %v1561
      %1595 = vmatprep.subr.bf16.mxu0 0
      %1596 = vmatpush2.bf16.msra.mxu0 0
      %1597 = vmatprep.subr.bf16.mxu0 0
      %1598 = vmatpush2.bf16.msra.mxu0 0
      %1599 = vmatprep.subr.bf16.mxu0 0
      %1600 = vmatpush2.bf16.msra.mxu0 0
      %1601 = vmatprep.subr.bf16.mxu0 0
      %1602 = vmatpush2.bf16.msra.mxu0 0
      %1603 = vmatprep.subr.bf16.mxu0 0
      %1604 = vmatpush2.bf16.msra.mxu0 0
      %1605 = vmatprep.subr.bf16.mxu0 0
      %1606 = vmatpush2.bf16.msra.mxu0 0
      %1607 = vmatprep.subr.bf16.mxu0 0
      %1608 = vmatpush2.bf16.msra.mxu0 0
      %1609 = vmatprep.subr.bf16.mxu0 0
      %1610 = vmatpush2.bf16.msra.mxu0 0
      %1611 = vmatprep.mubr.bf16.mxu0 0
      %1612 = vmatmul.mubr.bf16.gmra.mxu0 %v1565
      %v1613 = vpop.f32.mrf.mxu0
      %v1614 = vadd.f32 %v1458, %v1613
      %v1615 = vpop.f32.mrf.mxu0
      %v1616 = vpop.f32.mrf.mxu0
      %v1617 = vadd.f32 %v1461, %v1616
      %v1618 = vpop.f32.mrf.mxu0
      %1619 = vmatprep.mubr.bf16.mxu0 0
      %1620 = vmatmul.mubr.bf16.gmra.mxu0 %v1568
      %v1621 = vpop.f32.mrf.mxu0
      %v1622 = vadd.f32 %v1466, %v1621
      %v1623 = vpop.f32.mrf.mxu0
      %v1624 = vpop.f32.mrf.mxu0
      %v1625 = vadd.f32 %v1469, %v1624
      %v1626 = vpop.f32.mrf.mxu0
      %1627 = vmatprep.mubr.bf16.mxu0 0
      %1628 = vmatmul.mubr.bf16.gmra.mxu0 %v1571
      %v1629 = vpop.f32.mrf.mxu0
      %v1630 = vadd.f32 %v1474, %v1629
      %v1631 = vpop.f32.mrf.mxu0
      %v1632 = vpop.f32.mrf.mxu0
      %v1633 = vadd.f32 %v1477, %v1632
      %v1634 = vpop.f32.mrf.mxu0
      %1635 = vmatprep.mubr.bf16.mxu0 0
      %1636 = vmatmul.mubr.bf16.gmra.mxu0 %v1574
      %v1637 = vpop.f32.mrf.mxu0
      %v1638 = vadd.f32 %v1482, %v1637
      %v1639 = vpop.f32.mrf.mxu0
      %v1640 = vpop.f32.mrf.mxu0
      %v1641 = vadd.f32 %v1485, %v1640
      %v1642 = vpop.f32.mrf.mxu0
      %1643 = vdwg.mxu0
      %v1644 = vld [vmem:[#allocation3 + $0x4] sm:$0xf]
      %v1645 = vld [vmem:[#allocation3 + $0x8] sm:$0xf]
      %v1646 = vld [vmem:[#allocation3 + $0xc] sm:$0xf]
      %v1647 = vld [vmem:[#allocation3 + $0x10] sm:$0xf]
      %v1648 = vld [vmem:[#allocation3 + $0x14] sm:$0xf]
      %v1649 = vld [vmem:[#allocation3 + $0x18] sm:$0xf]
      %v1650 = vld [vmem:[#allocation3 + $0x1c] sm:$0xf]
      %v1651 = vld [vmem:[#allocation3 + $0x20] sm:$0xf]
      %v1652 = vld [vmem:[#allocation3 + $0x24] sm:$0x1]
      %v1653 = vsel %vm1050, %v1644, 0
      %v1654 = vsel %vm1051, %v1645, 0
      %v1655 = vsel %vm1052, %v1646, 0
      %v1656 = vsel %vm1053, %v1647, 0
      %v1657 = vsel %vm1054, %v1648, 0
      %v1658 = vsel %vm1055, %v1649, 0
      %v1659 = vsel %vm1056, %v1650, 0
      %v1660 = vsel %vm1057, %v1651, 0
      %v1661 = vsel %vm1058, %v1652, 0
      %s1662 = scalar_lea.vmem %s3, 24
      %v1663 = vld [vmem:[%s1662] sm:$0xf]
      %v1664 = vld [vmem:[%s1662 + $0x4] sm:$0xf]
      %v1665 = vld [vmem:[%s1662 + $0x8] sm:$0xf]
      %v1675 = vunpack.c.l.b16 %v1653
      %v1676 = vunpack.c.l.b16 %v1654
      %v1677 = vunpack.c.l.b16 %v1655
      %v1678 = vunpack.c.l.b16 %v1656
      %v1679 = vunpack.c.l.b16 %v1657
      %v1680 = vunpack.c.l.b16 %v1658
      %v1681 = vunpack.c.l.b16 %v1659
      %v1682 = vunpack.c.l.b16 %v1660
      %v1683 = vunpack.c.l.b16 %v1661
      %v1684 = vpack.c.b16 %v1676, %v1675
      %v1685 = vpack.c.b16 %v1678, %v1677
      %v1686 = vpack.c.b16 %v1680, %v1679
      %v1687 = vpack.c.b16 %v1682, %v1681
      %v1688 = vpack.c.b16 %v1683, %v1683
      %v1690 = vshrl.u32 %v1684, 16
      %v1692 = vshll.u32 %v1684, 16
      %v1694 = vrot.slane %v1692, 1
      %v1695 = vor.u32 %v1690, %v1694
      %v1697 = vshll.u32 %v1685, 16
      %v1699 = vrot.slane %v1697, 1
      %v1700 = vsel %vm1094, %v1695, %v1699
      %v1701 = vshrl.u32 %v1685, 16
      %v1703 = vor.u32 %v1701, %v1699
      %v1705 = vshll.u32 %v1686, 16
      %v1707 = vrot.slane %v1705, 1
      %v1708 = vsel %vm1094, %v1703, %v1707
      %v1709 = vshrl.u32 %v1686, 16
      %v1711 = vor.u32 %v1709, %v1707
      %v1713 = vshll.u32 %v1687, 16
      %v1715 = vrot.slane %v1713, 1
      %v1716 = vsel %vm1094, %v1711, %v1715
      %v1717 = vshrl.u32 %v1687, 16
      %v1719 = vor.u32 %v1717, %v1715
      %v1721 = vshll.u32 %v1688, 16
      %v1723 = vrot.slane %v1721, 1
      %v1724 = vsel %vm1094, %v1719, %v1723
      %v1728 = vunpack.c.l.b16 %v1663
      %v1729 = vunpack.c.l.b16 %v1664
      %v1730 = vunpack.c.l.b16 %v1665
      %v1731 = vpack.c.b16 %v1729, %v1728
      %v1732 = vpack.c.b16 %v1730, %v1730
      %v1735 = vsel %vm1406, %v1700, 0
      %v1738 = vsel %vm1406, %v1708, 0
      %v1741 = vsel %vm1406, %v1716, 0
      %v1744 = vsel %vm1406, %v1724, 0
      %v1747 = vsel %vm1419, %v1732, 0
      %1749 = vmatprep.subr.bf16.mxu0 0
      %1750 = vmatpush1.bf16.msra.mxu0 0
      %1751 = vmatprep.subr.bf16.mxu0 0
      %1752 = vmatpush1.bf16.msra.mxu0 0
      %1753 = vmatprep.subr.bf16.mxu0 0
      %1754 = vmatpush1.bf16.msra.mxu0 0
      %1755 = vmatprep.subr.bf16.mxu0 0
      %1756 = vmatpush1.bf16.msra.mxu0 0
      %1757 = vmatprep.subr.bf16.mxu0 0
      %1758 = vmatpush1.bf16.msra.mxu0 0
      %1759 = vmatprep.subr.bf16.mxu0 0
      %1760 = vmatpush1.bf16.msra.mxu0 0
      %1761 = vmatprep.subr.bf16.mxu0 0
      %1762 = vmatpush1.bf16.msra.mxu0 %v1747
      %1763 = vmatprep.subr.bf16.mxu0 0
      %1764 = vmatpush1.bf16.msra.mxu0 %v1731
      %1765 = vmatprep.subr.bf16.mxu0 0
      %1766 = vmatpush2.bf16.msra.mxu0 0
      %1767 = vmatprep.subr.bf16.mxu0 0
      %1768 = vmatpush2.bf16.msra.mxu0 0
      %1769 = vmatprep.subr.bf16.mxu0 0
      %1770 = vmatpush2.bf16.msra.mxu0 0
      %1771 = vmatprep.subr.bf16.mxu0 0
      %1772 = vmatpush2.bf16.msra.mxu0 0
      %1773 = vmatprep.subr.bf16.mxu0 0
      %1774 = vmatpush2.bf16.msra.mxu0 0
      %1775 = vmatprep.subr.bf16.mxu0 0
      %1776 = vmatpush2.bf16.msra.mxu0 0
      %1777 = vmatprep.subr.bf16.mxu0 0
      %1778 = vmatpush2.bf16.msra.mxu0 0
      %1779 = vmatprep.subr.bf16.mxu0 0
      %1780 = vmatpush2.bf16.msra.mxu0 0
      %1781 = vmatprep.mubr.bf16.mxu0 0
      %1782 = vmatmul.mubr.bf16.gmra.mxu0 %v1735
      %v1783 = vpop.f32.mrf.mxu0
      %v1784 = vadd.f32 0.0, %v1783
      %v1785 = vpop.f32.mrf.mxu0
      %v1786 = vpop.f32.mrf.mxu0
      %v1787 = vadd.f32 0.0, %v1786
      %v1788 = vpop.f32.mrf.mxu0
      %1789 = vmatprep.mubr.bf16.mxu0 0
      %1790 = vmatmul.mubr.bf16.gmra.mxu0 %v1738
      %v1791 = vpop.f32.mrf.mxu0
      %v1792 = vadd.f32 0.0, %v1791
      %v1793 = vpop.f32.mrf.mxu0
      %v1794 = vpop.f32.mrf.mxu0
      %v1795 = vadd.f32 0.0, %v1794
      %v1796 = vpop.f32.mrf.mxu0
      %1797 = vmatprep.mubr.bf16.mxu0 0
      %1798 = vmatmul.mubr.bf16.gmra.mxu0 %v1741
      %v1799 = vpop.f32.mrf.mxu0
      %v1800 = vadd.f32 0.0, %v1799
      %v1801 = vpop.f32.mrf.mxu0
      %v1802 = vpop.f32.mrf.mxu0
      %v1803 = vadd.f32 0.0, %v1802
      %v1804 = vpop.f32.mrf.mxu0
      %1805 = vmatprep.mubr.bf16.mxu0 0
      %1806 = vmatmul.mubr.bf16.gmra.mxu0 %v1744
      %v1807 = vpop.f32.mrf.mxu0
      %v1808 = vadd.f32 0.0, %v1807
      %v1809 = vpop.f32.mrf.mxu0
      %v1810 = vpop.f32.mrf.mxu0
      %v1811 = vadd.f32 0.0, %v1810
      %v1812 = vpop.f32.mrf.mxu0
      %1813 = vdwg.mxu0
      %v1814 = vadd.f32 %v1614, %v1784
      %v1815 = vadd.f32 %v1617, %v1787
      %v1816 = vadd.f32 %v1622, %v1792
      %v1817 = vadd.f32 %v1625, %v1795
      %v1818 = vadd.f32 %v1630, %v1800
      %v1819 = vadd.f32 %v1633, %v1803
      %v1820 = vadd.f32 %v1638, %v1808
      %v1821 = vadd.f32 %v1641, %v1811
      %v1822 = vld [vmem:[%s4] sm:$0x1]
      %v1824 = vlaneseq
      %v1825 = vshrl.u32 %v1824, 7
      %v1826 = vsub.s32 0, %v1825
      %v1827 = vrot.slane %v1822, %v1826
      %v1829 = vadd.f32 %v1814, %v1827
      %v1830 = vadd.f32 %v1815, %v1827
      %v1831 = vadd.f32 %v1816, %v1827
      %v1832 = vadd.f32 %v1817, %v1827
      %v1833 = vadd.f32 %v1818, %v1827
      %v1834 = vadd.f32 %v1819, %v1827
      %v1835 = vadd.f32 %v1820, %v1827
      %v1836 = vadd.f32 %v1821, %v1827
      %v1837 = vmax.f32 %v1829, 0.0
      %v1838 = vmax.f32 %v1830, 0.0
      %v1839 = vmax.f32 %v1831, 0.0
      %v1840 = vmax.f32 %v1832, 0.0
      %v1841 = vmax.f32 %v1833, 0.0
      %v1842 = vmax.f32 %v1834, 0.0
      %v1843 = vmax.f32 %v1835, 0.0
      %v1844 = vmax.f32 %v1836, 0.0
      %1845 = vst.msk [vmem:[%s229] sm:$0xff] %vm495, %v1837
      %1846 = vst.msk [vmem:[%s229 + $0x8] sm:$0xff] %vm495, %v1838
      %1847 = vst.msk [vmem:[%s229 + $0x10] sm:$0xff] %vm495, %v1839
      %1848 = vst.msk [vmem:[%s229 + $0x18] sm:$0xff] %vm495, %v1840
      %1849 = vst.msk [vmem:[%s229 + $0x20] sm:$0xff] %vm495, %v1841
      %1850 = vst.msk [vmem:[%s229 + $0x28] sm:$0xff] %vm495, %v1842
      %1851 = vst.msk [vmem:[%s229 + $0x30] sm:$0xff] %vm495, %v1843
      %1852 = vst.msk [vmem:[%s229 + $0x38] sm:$0xff] %vm495, %v1844
      %s1853 = smul.u32 8, %s16
      %p1854 = scmp.lt.s32.totalorder %s1853, 15
      %s1855 = scalar_select %p1854, %s1853, 15
      %s1856 = smul.addr %s1855, 8
      %s1857 = scalar_lea.vmem %s5, %s1856
      // Predicated region
      $region41: #{down_forward.1} parent=39 // pred_check
        %p1858 = pneg %p144
      $region42: #{down_forward.1} parent=39 // pred_check_branch
        %1860 = sbr.rel (%p1858) target = $region44
      $region43: #{down_forward.1} parent=39 // pred_region
        %s1861 = smul.u32 8, %s16
      $region44: #{down_forward.1} parent=39 // pred_fallthru
        _
    $region40: #{down_forward.1} parent=5 // pred_fallthru
      _
    %p1862 = scmp.le.s32.totalorder 2, %s11
    // Predicated region
    $region45: #{down_forward.1} parent=5 // pred_check
      %p1863 = pneg %p1862
    $region46: #{down_forward.1} parent=5 // pred_check_branch
      %1865 = sbr.rel (%p1863) target = $region48
    $region47: #{down_forward.1} parent=5 // pred_region
      %s1866 = ssub.s32 %s11, 2
      // Predicated region
      $region49: #{down_forward.1} parent=47 // pred_check
        %p1867 = pneg %p150
      $region50: #{down_forward.1} parent=47 // pred_check_branch
        %1869 = sbr.rel (%p1867) target = $region52
      $region51: #{down_forward.1} parent=47 // pred_region
        %s1870 = smul.u32 8, %s17
        %p1871 = scmp.lt.s32.totalorder %s1870, 15
        %s1872 = scalar_select %p1871, %s1870, 15
        %s1873 = smul.addr %s1872, 8
        %s1874 = scalar_lea.vmem %s5, %s1873
      $region52: #{down_forward.1} parent=47 // pred_fallthru
        _
    $region48: #{down_forward.1} parent=5 // pred_fallthru
      _
  $region6: #{down_forward.1} parent=0 // loop_footer
    %s15 = sadd.s32 1, %s11
  $region7: #{down_forward.1} parent=0 // loop_footer_branch
    %10 = sbr.rel target = $region3
  $region8: #{down_forward.1} parent=0 // loop_exit
    _

</llo_original>
